<compile_context>
chip_gen: v7x
topology: tpu7x:2x2x1
jax: 0.10.0
libtpu: 0.0.40
codegen_flags: <defaults>
</compile_context>

<pallas_src>
import math

import jax
import jax.numpy as jnp
from jax.experimental import pallas as pl
from jax.experimental.pallas import tpu as pltpu

NEG_SLOPE = 0.3            # LeakyReLU negative_slope used by DeepFc
MXU_DTYPE = jnp.bfloat16   # matmul-input dtype; accumulation stays f32


def _round_up(x, m):
    return ((x + m - 1) // m) * m


def _leaky_relu(x):
    return jnp.where(x >= 0.0, x, NEG_SLOPE * x)


# ------------------------------ Pallas kernel ------------------------------

def _deepfc_kernel(x_ref, w1_ref, b1_ref, w2_ref, b2_ref, w3_ref, b3_ref,
                   o_ref):
    """Fused fc1 -> fc2 -> LeakyReLU -> fc3 -> LeakyReLU for one row tile."""
    x = x_ref[...]
    h = jnp.dot(x.astype(MXU_DTYPE), w1_ref[...],
                preferred_element_type=jnp.float32) + b1_ref[...]
    h = jnp.dot(h.astype(MXU_DTYPE), w2_ref[...],
                preferred_element_type=jnp.float32) + b2_ref[...]
    h = _leaky_relu(h)
    y = jnp.dot(h.astype(MXU_DTYPE), w3_ref[...],
                preferred_element_type=jnp.float32) + b3_ref[...]
    y = _leaky_relu(y)
    o_ref[...] = y.astype(o_ref.dtype)


def deep_fc_forward(x, params):
    """x: (M, input_dim) f32  ->  (M, output_dim) f32."""
    M, D = x.shape
    assert D == params["input_dim"]
    Dp, Hp = params["w1"].shape
    Op = params["w3"].shape[1]
    O = params["output_dim"]

    # Row tile: whole (padded) batch if small, otherwise 256-row tiles.
    tm = min(_round_up(M, 8), 256)
    Mp = _round_up(M, tm)
    xp = jnp.zeros((Mp, Dp), jnp.float32).at[:M, :D].set(x)

    full = lambda i: (0, 0)
    out = pl.pallas_call(
        _deepfc_kernel,
        out_shape=jax.ShapeDtypeStruct((Mp, Op), jnp.float32),
        grid=(Mp // tm,),
        in_specs=[pl.BlockSpec((tm, Dp), lambda i: (i, 0)),   # x row tile
                  pl.BlockSpec((Dp, Hp), full),               # W1 (bf16)
                  pl.BlockSpec((1, Hp), full),                # b1 (f32)
                  pl.BlockSpec((Hp, Hp), full),               # W2 (bf16)
                  pl.BlockSpec((1, Hp), full),                # b2 (f32)
                  pl.BlockSpec((Hp, Op), full),               # W3 (bf16)
                  pl.BlockSpec((1, Op), full)],               # b3 (f32)
        out_specs=pl.BlockSpec((tm, Op), lambda i: (i, 0)),
        compiler_params=pltpu.CompilerParams(
            dimension_semantics=("parallel",)),
    )(xp, params["w1"], params["b1"], params["w2"], params["b2"],
      params["w3"], params["b3"])
    return out[:M, :O]


# ----------------------------- parameter init ------------------------------

def init_deep_fc(key, input_dim, output_dim):
    """torch nn.Linear default init; weights stored [in, out], zero-padded to
    multiples of 128 and cast to bf16; biases kept in f32."""
    hidden = 2 * input_dim
    Dp = _round_up(input_dim, 128)
    Hp = _round_up(hidden, 128)
    Op = _round_up(output_dim, 128)

    def lin(k, fan_in, fan_out, p_in, p_out):
        kw, kb = jax.random.split(k)
        bound = 1.0 / math.sqrt(fan_in)
        w = jax.random.uniform(kw, (fan_in, fan_out), jnp.float32, -bound, bound)
        b = jax.random.uniform(kb, (fan_out,), jnp.float32, -bound, bound)
        wp = jnp.zeros((p_in, p_out), jnp.float32).at[:fan_in, :fan_out].set(w)
        bp = jnp.zeros((1, p_out), jnp.float32).at[0, :fan_out].set(b)
        return wp.astype(MXU_DTYPE), bp

    k1, k2, k3 = jax.random.split(key, 3)
    w1, b1 = lin(k1, input_dim, hidden, Dp, Hp)
    w2, b2 = lin(k2, hidden, hidden, Hp, Hp)
    w3, b3 = lin(k3, hidden, output_dim, Hp, Op)
    return {"w1": w1, "b1": b1, "w2": w2, "b2": b2, "w3": w3, "b3": b3,
            "input_dim": input_dim, "output_dim": output_dim}


# ------------------------- pure-JAX reference check -------------------------

def deep_fc_ref(x, params):
    """Mirrors the kernel math (bf16 matmul inputs, f32 accumulation)."""
    def mm(a, w):
        return jnp.dot(a.astype(MXU_DTYPE), w,
                       preferred_element_type=jnp.float32)
    M, D = x.shape
    Dp = params["w1"].shape[0]
    xp = jnp.zeros((M, Dp), jnp.float32).at[:, :D].set(x)
    h = mm(xp, params["w1"]) + params["b1"]
    h = mm(h, params["w2"]) + params["b2"]
    h = _leaky_relu(h)
    y = mm(h, params["w3"]) + params["b3"]
    y = _leaky_relu(y)
    return y[:, :params["output_dim"]]


# TODO(synk): DeepFc.self.output / out_feature() is host-side attribute
# caching, not part of the forward computation; callers can keep the returned
# array instead.

# --------------------------------- main -------------------------------------

if __name__ == "__main__":
    INPUT_DIM = 256    # MFGCN instantiates DeepFc(256, 196) after the GNN stack
    OUTPUT_DIM = 196
    BATCH = 8

    key = jax.random.PRNGKey(0)
    pkey, xkey = jax.random.split(key)
    params = init_deep_fc(pkey, INPUT_DIM, OUTPUT_DIM)
    x = jax.random.normal(xkey, (BATCH, INPUT_DIM), jnp.float32)

    out = deep_fc_forward(x, params)
    jax.block_until_ready(out)

    ref = deep_fc_ref(x, params)
    assert out.shape == (BATCH, OUTPUT_DIM)
    assert bool(jnp.all(jnp.isfinite(out)))
    assert bool(jnp.allclose(out, ref, rtol=2e-2, atol=2e-2))
    print("KERNEL_OK")
</pallas_src>

<mosaic_0001>
module attributes {stable_mosaic.version = 11 : i64} {
  func.func @_deepfc_kernel(%arg0: i32, %arg1: memref<8x256xf32, #tpu.memory_space<vmem>>, %arg2: memref<256x512xbf16, #tpu.memory_space<vmem>>, %arg3: memref<1x512xf32, #tpu.memory_space<vmem>>, %arg4: memref<512x512xbf16, #tpu.memory_space<vmem>>, %arg5: memref<1x512xf32, #tpu.memory_space<vmem>>, %arg6: memref<512x256xbf16, #tpu.memory_space<vmem>>, %arg7: memref<1x256xf32, #tpu.memory_space<vmem>>, %arg8: memref<8x256xf32, #tpu.memory_space<vmem>>) attributes {dimension_semantics = [#tpu.dimension_semantics<parallel>], iteration_bounds = array<i64: 1>, scalar_prefetch = 0 : i64, scratch_operands = 0 : i64, tpu.core_type = #tpu.core_type<tc>, window_params = [{transform_indices = @transform_0, window_bounds = array<i64: 8, 256>}, {pipeline_mode = #tpu.pipeline_mode<synchronous>, transform_indices = @transform_1, window_bounds = array<i64: 256, 512>}, {pipeline_mode = #tpu.pipeline_mode<synchronous>, transform_indices = @transform_2, window_bounds = array<i64: 1, 512>}, {pipeline_mode = #tpu.pipeline_mode<synchronous>, transform_indices = @transform_3, window_bounds = array<i64: 512, 512>}, {pipeline_mode = #tpu.pipeline_mode<synchronous>, transform_indices = @transform_4, window_bounds = array<i64: 1, 512>}, {pipeline_mode = #tpu.pipeline_mode<synchronous>, transform_indices = @transform_5, window_bounds = array<i64: 512, 256>}, {pipeline_mode = #tpu.pipeline_mode<synchronous>, transform_indices = @transform_6, window_bounds = array<i64: 1, 256>}, {transform_indices = @transform_7, window_bounds = array<i64: 8, 256>}]} {
    %c0 = arith.constant 0 : index
    %c0_0 = arith.constant 0 : index
    %0 = vector.load %arg1[%c0, %c0_0] : memref<8x256xf32, #tpu.memory_space<vmem>>, vector<8x256xf32>
    %1 = arith.truncf %0 : vector<8x256xf32> to vector<8x256xbf16>
    %c0_1 = arith.constant 0 : index
    %c0_2 = arith.constant 0 : index
    %2 = vector.load %arg2[%c0_1, %c0_2] : memref<256x512xbf16, #tpu.memory_space<vmem>>, vector<256x512xbf16>
    %cst = arith.constant dense<0.000000e+00> : vector<8x512xf32>
    %3 = tpu.matmul %1, %2, %cst {dimension_numbers = #tpu.dot_dimension_numbers<[1], [0], [0], [1], [0, 0, 1, 1], [], []>} : vector<8x256xbf16>, vector<256x512xbf16>, vector<8x512xf32> -> vector<8x512xf32>
    %c0_3 = arith.constant 0 : index
    %c0_4 = arith.constant 0 : index
    %4 = vector.load %arg3[%c0_3, %c0_4] : memref<1x512xf32, #tpu.memory_space<vmem>>, vector<1x512xf32>
    %5 = vector.broadcast %4 : vector<1x512xf32> to vector<8x512xf32>
    %6 = arith.addf %3, %5 : vector<8x512xf32>
    %7 = arith.truncf %6 : vector<8x512xf32> to vector<8x512xbf16>
    %c0_5 = arith.constant 0 : index
    %c0_6 = arith.constant 0 : index
    %8 = vector.load %arg4[%c0_5, %c0_6] : memref<512x512xbf16, #tpu.memory_space<vmem>>, vector<512x512xbf16>
    %cst_7 = arith.constant dense<0.000000e+00> : vector<8x512xf32>
    %9 = tpu.matmul %7, %8, %cst_7 {dimension_numbers = #tpu.dot_dimension_numbers<[1], [0], [0], [1], [0, 0, 1, 1], [], []>} : vector<8x512xbf16>, vector<512x512xbf16>, vector<8x512xf32> -> vector<8x512xf32>
    %c0_8 = arith.constant 0 : index
    %c0_9 = arith.constant 0 : index
    %10 = vector.load %arg5[%c0_8, %c0_9] : memref<1x512xf32, #tpu.memory_space<vmem>>, vector<1x512xf32>
    %11 = vector.broadcast %10 : vector<1x512xf32> to vector<8x512xf32>
    %12 = arith.addf %9, %11 : vector<8x512xf32>
    %cst_10 = arith.constant 0.000000e+00 : f32
    %13 = vector.broadcast %cst_10 : f32 to vector<8x512xf32>
    %14 = arith.cmpf oge, %12, %13 : vector<8x512xf32>
    %cst_11 = arith.constant 3.000000e-01 : f32
    %15 = vector.broadcast %cst_11 : f32 to vector<8x512xf32>
    %16 = arith.mulf %15, %12 : vector<8x512xf32>
    %17 = arith.select %14, %12, %16 : vector<8x512xi1>, vector<8x512xf32>
    %18 = arith.truncf %17 : vector<8x512xf32> to vector<8x512xbf16>
    %c0_12 = arith.constant 0 : index
    %c0_13 = arith.constant 0 : index
    %19 = vector.load %arg6[%c0_12, %c0_13] : memref<512x256xbf16, #tpu.memory_space<vmem>>, vector<512x256xbf16>
    %cst_14 = arith.constant dense<0.000000e+00> : vector<8x256xf32>
    %20 = tpu.matmul %18, %19, %cst_14 {dimension_numbers = #tpu.dot_dimension_numbers<[1], [0], [0], [1], [0, 0, 1, 1], [], []>} : vector<8x512xbf16>, vector<512x256xbf16>, vector<8x256xf32> -> vector<8x256xf32>
    %c0_15 = arith.constant 0 : index
    %c0_16 = arith.constant 0 : index
    %21 = vector.load %arg7[%c0_15, %c0_16] : memref<1x256xf32, #tpu.memory_space<vmem>>, vector<1x256xf32>
    %22 = vector.broadcast %21 : vector<1x256xf32> to vector<8x256xf32>
    %23 = arith.addf %20, %22 : vector<8x256xf32>
    %cst_17 = arith.constant 0.000000e+00 : f32
    %24 = vector.broadcast %cst_17 : f32 to vector<8x256xf32>
    %25 = arith.cmpf oge, %23, %24 : vector<8x256xf32>
    %cst_18 = arith.constant 3.000000e-01 : f32
    %26 = vector.broadcast %cst_18 : f32 to vector<8x256xf32>
    %27 = arith.mulf %26, %23 : vector<8x256xf32>
    %28 = arith.select %25, %23, %27 : vector<8x256xi1>, vector<8x256xf32>
    %c0_19 = arith.constant 0 : index
    %c0_20 = arith.constant 0 : index
    %29 = vector.load %arg8[%c0_19, %c0_20] : memref<8x256xf32, #tpu.memory_space<vmem>>, vector<8x256xf32>
    tpu.vector_store %arg8[%c0_19, %c0_20], %28 {strides = array<i32>} : memref<8x256xf32, #tpu.memory_space<vmem>>, vector<8x256xf32>,
    return
  }
  func.func @transform_0(%arg0: i32) -> (i32, i32) {
    %c0_i32 = arith.constant 0 : i32
    %c0_i32_0 = arith.constant 0 : i32
    return %arg0, %c0_i32 : i32, i32
  }
  func.func @transform_1(%arg0: i32) -> (i32, i32) {
    %c0_i32 = arith.constant 0 : i32
    %c0_i32_0 = arith.constant 0 : i32
    %c0_i32_1 = arith.constant 0 : i32
    return %c0_i32, %c0_i32_0 : i32, i32
  }
  func.func @transform_2(%arg0: i32) -> (i32, i32) {
    %c0_i32 = arith.constant 0 : i32
    %c0_i32_0 = arith.constant 0 : i32
    %c0_i32_1 = arith.constant 0 : i32
    return %c0_i32, %c0_i32_0 : i32, i32
  }
  func.func @transform_3(%arg0: i32) -> (i32, i32) {
    %c0_i32 = arith.constant 0 : i32
    %c0_i32_0 = arith.constant 0 : i32
    %c0_i32_1 = arith.constant 0 : i32
    return %c0_i32, %c0_i32_0 : i32, i32
  }
  func.func @transform_4(%arg0: i32) -> (i32, i32) {
    %c0_i32 = arith.constant 0 : i32
    %c0_i32_0 = arith.constant 0 : i32
    %c0_i32_1 = arith.constant 0 : i32
    return %c0_i32, %c0_i32_0 : i32, i32
  }
  func.func @transform_5(%arg0: i32) -> (i32, i32) {
    %c0_i32 = arith.constant 0 : i32
    %c0_i32_0 = arith.constant 0 : i32
    %c0_i32_1 = arith.constant 0 : i32
    return %c0_i32, %c0_i32_0 : i32, i32
  }
  func.func @transform_6(%arg0: i32) -> (i32, i32) {
    %c0_i32 = arith.constant 0 : i32
    %c0_i32_0 = arith.constant 0 : i32
    %c0_i32_1 = arith.constant 0 : i32
    return %c0_i32, %c0_i32_0 : i32, i32
  }
  func.func @transform_7(%arg0: i32) -> (i32, i32) {
    %c0_i32 = arith.constant 0 : i32
    %c0_i32_0 = arith.constant 0 : i32
    return %arg0, %c0_i32 : i32, i32
  }
}

</mosaic_0001>

<llo_original>
// kernel: tpu_custom_call.1
$region0: #{tpu_custom_call.1}
  #allocation0 [shape = 'u32[]', space=smem, size = 0x4, offset = 0x4, fixed_abs, tag = 'smem constant byte address 0x4 - core index']
  #allocation1 [shape = 'u32[144,128]{1,0:T(1,128)}', space=vmem, size = 0x12000, scoped, tag = 'internal scratch']
  %s0 = inlined_call_operand.hbm [shape: f32[8,256], index: 0, kind: input, shape index: {}]
  %s1 = inlined_call_operand.hbm [shape: bf16[256,512], index: 1, kind: input, shape index: {}]
  %s2 = inlined_call_operand.vmem [shape: f32[1,512], index: 2, kind: input, shape index: {}]
  %s3 = inlined_call_operand.hbm [shape: bf16[512,512], index: 3, kind: input, shape index: {}]
  %s4 = inlined_call_operand.vmem [shape: f32[1,512], index: 4, kind: input, shape index: {}]
  %s5 = inlined_call_operand.hbm [shape: bf16[512,256], index: 5, kind: input, shape index: {}]
  %s6 = inlined_call_operand.vmem [shape: f32[1,256], index: 6, kind: input, shape index: {}]
  %s7 = inlined_call_operand.hbm [shape: f32[8,256], index: 7, kind: output, shape index: {}]
  %s8 = sld [smem:[#allocation0]]
  $region54: #{tpu_custom_call.1} parent=0
    _
  %s10 = ssub.s32 1, %s8
  %s11 = scalar_select 0, %s10, %s8
  $region1: #{tpu_custom_call.1} parent=0
    #allocation2 [shape = 'u8[8192]{0}', space=vmem, size = 0x2000, scoped, tag = 'input window, operand 0, single buffered']
    #allocation3 [shape = 's32[1]{0}', space=sflag, size = 0x4, scoped, tag = 'scoped memory for tpu_custom_call.1']
    #allocation4 [shape = 's32[1]{0}', space=sflag, size = 0x4, scoped, tag = 'scoped memory for tpu_custom_call.1']
    #allocation5 [shape = 'u8[262144]{0}', space=vmem, size = 0x40000, scoped, tag = 'input window, operand 1, single buffered']
    #allocation6 [shape = 's32[1]{0}', space=sflag, size = 0x4, scoped, tag = 'scoped memory for tpu_custom_call.1']
    #allocation7 [shape = 'u8[524288]{0}', space=vmem, size = 0x80000, scoped, tag = 'input window, operand 3, single buffered']
    #allocation8 [shape = 'u8[262144]{0}', space=vmem, size = 0x40000, scoped, tag = 'input window, operand 5, single buffered']
    #allocation9 [shape = 's32[1]{0}', space=sflag, size = 0x4, scoped, tag = 'scoped memory for tpu_custom_call.1']
    #allocation10 [shape = 'u8[8192]{0}', space=vmem, size = 0x2000, scoped, tag = 'output window, operand 0, single buffered']
    %12 = vsyncpa [#allocation3], 0
    %13 = vsyncpa [#allocation6], 0
    %14 = vsyncpa [#allocation9], 0
    %15 = vsyncpa [#allocation4], 0
    // Predicated region
    $region2: #{tpu_custom_call.1} parent=1 // pred_check
      _
    $region3: #{tpu_custom_call.1} parent=1 // pred_check_branch
      %17 = sbr.rel (0) target = $region5
    $region4: #{tpu_custom_call.1} parent=1 // pred_region
      %s19 = ssub.s32 256, 256
      %20 = vsyncadd [#allocation3], %s19
      %s22 = sshll.u32 [#allocation2], 4
      %s23 = int_to_ptr.vmem [resolvable:$true] %s22
      %25 = dma.hbm_to_vmem [thread:$0]  %s0, 256, %s23, [#allocation3]
    $region5: #{tpu_custom_call.1} parent=1 // pred_fallthru
      _
    // Predicated region
    $region6: #{tpu_custom_call.1} parent=1 // pred_check
      _
    $region7: #{tpu_custom_call.1} parent=1 // pred_check_branch
      %27 = sbr.rel (0) target = $region9
    $region8: #{tpu_custom_call.1} parent=1 // pred_region
      %s29 = ssub.s32 8192, 8192
      %30 = vsyncadd [#allocation6], %s29
      %s31 = sshll.u32 [#allocation5], 4
      %s32 = int_to_ptr.vmem [resolvable:$true] %s31
      %37 = dma.hbm_to_vmem [thread:$0]  %s1, 8192, %s32, [#allocation6], 256, 256, 16
    $region9: #{tpu_custom_call.1} parent=1 // pred_fallthru
      _
    // Predicated region
    $region10: #{tpu_custom_call.1} parent=1 // pred_check
      _
    $region11: #{tpu_custom_call.1} parent=1 // pred_check_branch
      %39 = sbr.rel (0) target = $region13
    $region12: #{tpu_custom_call.1} parent=1 // pred_region
      _
    $region13: #{tpu_custom_call.1} parent=1 // pred_fallthru
      _
    // Predicated region
    $region14: #{tpu_custom_call.1} parent=1 // pred_check
      _
    $region15: #{tpu_custom_call.1} parent=1 // pred_check_branch
      %41 = sbr.rel (0) target = $region17
    $region16: #{tpu_custom_call.1} parent=1 // pred_region
      %s43 = ssub.s32 16384, 16384
      %44 = vsyncadd [#allocation6], %s43
      %s45 = sshll.u32 [#allocation7], 4
      %s46 = int_to_ptr.vmem [resolvable:$true] %s45
      %51 = dma.hbm_to_vmem [thread:$0]  %s3, 16384, %s46, [#allocation6], 256, 256, 16
    $region17: #{tpu_custom_call.1} parent=1 // pred_fallthru
      _
    // Predicated region
    $region18: #{tpu_custom_call.1} parent=1 // pred_check
      _
    $region19: #{tpu_custom_call.1} parent=1 // pred_check_branch
      %53 = sbr.rel (0) target = $region21
    $region20: #{tpu_custom_call.1} parent=1 // pred_region
      _
    $region21: #{tpu_custom_call.1} parent=1 // pred_fallthru
      _
    // Predicated region
    $region22: #{tpu_custom_call.1} parent=1 // pred_check
      _
    $region23: #{tpu_custom_call.1} parent=1 // pred_check_branch
      %55 = sbr.rel (0) target = $region25
    $region24: #{tpu_custom_call.1} parent=1 // pred_region
      %s57 = ssub.s32 8192, 8192
      %58 = vsyncadd [#allocation9], %s57
      %s59 = sshll.u32 [#allocation8], 4
      %s60 = int_to_ptr.vmem [resolvable:$true] %s59
      %65 = dma.hbm_to_vmem [thread:$0]  %s5, 8192, %s60, [#allocation9], 128, 128, 8
    $region25: #{tpu_custom_call.1} parent=1 // pred_fallthru
      _
    // Predicated region
    $region26: #{tpu_custom_call.1} parent=1 // pred_check
      _
    $region27: #{tpu_custom_call.1} parent=1 // pred_check_branch
      %67 = sbr.rel (0) target = $region29
    $region28: #{tpu_custom_call.1} parent=1 // pred_region
      _
    $region29: #{tpu_custom_call.1} parent=1 // pred_fallthru
      _
    // Predicated region
    $region30: #{tpu_custom_call.1} parent=1 // pred_check
      _
    $region31: #{tpu_custom_call.1} parent=1 // pred_check_branch
      %69 = sbr.rel (0) target = $region33
    $region32: #{tpu_custom_call.1} parent=1 // pred_region
      %70 = dma.done [#allocation3], 256
    $region33: #{tpu_custom_call.1} parent=1 // pred_fallthru
      _
    // Predicated region
    $region34: #{tpu_custom_call.1} parent=1 // pred_check
      _
    $region35: #{tpu_custom_call.1} parent=1 // pred_check_branch
      %72 = sbr.rel (0) target = $region37
    $region36: #{tpu_custom_call.1} parent=1 // pred_region
      %73 = dma.done [#allocation6], 8192
    $region37: #{tpu_custom_call.1} parent=1 // pred_fallthru
      _
    // Predicated region
    $region38: #{tpu_custom_call.1} parent=1 // pred_check
      _
    $region39: #{tpu_custom_call.1} parent=1 // pred_check_branch
      %75 = sbr.rel (0) target = $region41
    $region40: #{tpu_custom_call.1} parent=1 // pred_region
      %76 = dma.done [#allocation6], 16384
    $region41: #{tpu_custom_call.1} parent=1 // pred_fallthru
      _
    // Predicated region
    $region42: #{tpu_custom_call.1} parent=1 // pred_check
      _
    $region43: #{tpu_custom_call.1} parent=1 // pred_check_branch
      %78 = sbr.rel (0) target = $region45
    $region44: #{tpu_custom_call.1} parent=1 // pred_region
      %79 = dma.done [#allocation9], 8192
    $region45: #{tpu_custom_call.1} parent=1 // pred_fallthru
      _
    %v80 = vld [vmem:[#allocation2] sm:$0xff]
    %v81 = vld [vmem:[#allocation2 + $0x8] sm:$0xff]
    %v82 = vpack.c.bf16 %v80, %v80
    %v83 = vpack.c.bf16 %v81, %v81
    %v84 = vld [vmem:[#allocation5] sm:$0xff]
    %v85 = vld [vmem:[#allocation5 + $0x8] sm:$0xff]
    %v86 = vld [vmem:[#allocation5 + $0x10] sm:$0xff]
    %v87 = vld [vmem:[#allocation5 + $0x18] sm:$0xff]
    %v88 = vld [vmem:[#allocation5 + $0x20] sm:$0xff]
    %v89 = vld [vmem:[#allocation5 + $0x28] sm:$0xff]
    %v90 = vld [vmem:[#allocation5 + $0x30] sm:$0xff]
    %v91 = vld [vmem:[#allocation5 + $0x38] sm:$0xff]
    %v92 = vld [vmem:[#allocation5 + $0x40] sm:$0xff]
    %v93 = vld [vmem:[#allocation5 + $0x48] sm:$0xff]
    %v94 = vld [vmem:[#allocation5 + $0x50] sm:$0xff]
    %v95 = vld [vmem:[#allocation5 + $0x58] sm:$0xff]
    %v96 = vld [vmem:[#allocation5 + $0x60] sm:$0xff]
    %v97 = vld [vmem:[#allocation5 + $0x68] sm:$0xff]
    %v98 = vld [vmem:[#allocation5 + $0x70] sm:$0xff]
    %v99 = vld [vmem:[#allocation5 + $0x78] sm:$0xff]
    %v100 = vld [vmem:[#allocation5 + $0x80] sm:$0xff]
    %v101 = vld [vmem:[#allocation5 + $0x88] sm:$0xff]
    %v102 = vld [vmem:[#allocation5 + $0x90] sm:$0xff]
    %v103 = vld [vmem:[#allocation5 + $0x98] sm:$0xff]
    %v104 = vld [vmem:[#allocation5 + $0xa0] sm:$0xff]
    %v105 = vld [vmem:[#allocation5 + $0xa8] sm:$0xff]
    %v106 = vld [vmem:[#allocation5 + $0xb0] sm:$0xff]
    %v107 = vld [vmem:[#allocation5 + $0xb8] sm:$0xff]
    %v108 = vld [vmem:[#allocation5 + $0xc0] sm:$0xff]
    %v109 = vld [vmem:[#allocation5 + $0xc8] sm:$0xff]
    %v110 = vld [vmem:[#allocation5 + $0xd0] sm:$0xff]
    %v111 = vld [vmem:[#allocation5 + $0xd8] sm:$0xff]
    %v112 = vld [vmem:[#allocation5 + $0xe0] sm:$0xff]
    %v113 = vld [vmem:[#allocation5 + $0xe8] sm:$0xff]
    %v114 = vld [vmem:[#allocation5 + $0xf0] sm:$0xff]
    %v115 = vld [vmem:[#allocation5 + $0xf8] sm:$0xff]
    %v116 = vld [vmem:[#allocation5 + $0x100] sm:$0xff]
    %v117 = vld [vmem:[#allocation5 + $0x108] sm:$0xff]
    %v118 = vld [vmem:[#allocation5 + $0x110] sm:$0xff]
    %v119 = vld [vmem:[#allocation5 + $0x118] sm:$0xff]
    %v120 = vld [vmem:[#allocation5 + $0x120] sm:$0xff]
    %v121 = vld [vmem:[#allocation5 + $0x128] sm:$0xff]
    %v122 = vld [vmem:[#allocation5 + $0x130] sm:$0xff]
    %v123 = vld [vmem:[#allocation5 + $0x138] sm:$0xff]
    %v124 = vld [vmem:[#allocation5 + $0x140] sm:$0xff]
    %v125 = vld [vmem:[#allocation5 + $0x148] sm:$0xff]
    %v126 = vld [vmem:[#allocation5 + $0x150] sm:$0xff]
    %v127 = vld [vmem:[#allocation5 + $0x158] sm:$0xff]
    %v128 = vld [vmem:[#allocation5 + $0x160] sm:$0xff]
    %v129 = vld [vmem:[#allocation5 + $0x168] sm:$0xff]
    %v130 = vld [vmem:[#allocation5 + $0x170] sm:$0xff]
    %v131 = vld [vmem:[#allocation5 + $0x178] sm:$0xff]
    %v132 = vld [vmem:[#allocation5 + $0x180] sm:$0xff]
    %v133 = vld [vmem:[#allocation5 + $0x188] sm:$0xff]
    %v134 = vld [vmem:[#allocation5 + $0x190] sm:$0xff]
    %v135 = vld [vmem:[#allocation5 + $0x198] sm:$0xff]
    %v136 = vld [vmem:[#allocation5 + $0x1a0] sm:$0xff]
    %v137 = vld [vmem:[#allocation5 + $0x1a8] sm:$0xff]
    %v138 = vld [vmem:[#allocation5 + $0x1b0] sm:$0xff]
    %v139 = vld [vmem:[#allocation5 + $0x1b8] sm:$0xff]
    %v140 = vld [vmem:[#allocation5 + $0x1c0] sm:$0xff]
    %v141 = vld [vmem:[#allocation5 + $0x1c8] sm:$0xff]
    %v142 = vld [vmem:[#allocation5 + $0x1d0] sm:$0xff]
    %v143 = vld [vmem:[#allocation5 + $0x1d8] sm:$0xff]
    %v144 = vld [vmem:[#allocation5 + $0x1e0] sm:$0xff]
    %v145 = vld [vmem:[#allocation5 + $0x1e8] sm:$0xff]
    %v146 = vld [vmem:[#allocation5 + $0x1f0] sm:$0xff]
    %v147 = vld [vmem:[#allocation5 + $0x1f8] sm:$0xff]
    %v148 = vld [vmem:[%s2] sm:$0xf]
    %v150 = vlaneseq
    %v151 = vshrl.u32 %v150, 7
    %v152 = vsub.s32 0, %v151
    %v153 = vrot.slane %v148, %v152
    %v154 = vlaneseq
    %v155 = vshrl.u32 %v154, 7
    %v156 = vsub.s32 1, %v155
    %v157 = vrot.slane %v148, %v156
    %v158 = vlaneseq
    %v159 = vshrl.u32 %v158, 7
    %v160 = vsub.s32 2, %v159
    %v161 = vrot.slane %v148, %v160
    %v162 = vlaneseq
    %v163 = vshrl.u32 %v162, 7
    %v164 = vsub.s32 3, %v163
    %v165 = vrot.slane %v148, %v164
    %v234 = vunpack.c.l.b16 %v84
    %v235 = vunpack.c.h.b16 %v84
    %v236 = vunpack.c.l.b16 %v85
    %v237 = vunpack.c.h.b16 %v85
    %v238 = vunpack.c.l.b16 %v86
    %v239 = vunpack.c.h.b16 %v86
    %v240 = vunpack.c.l.b16 %v87
    %v241 = vunpack.c.h.b16 %v87
    %v242 = vunpack.c.l.b16 %v88
    %v243 = vunpack.c.h.b16 %v88
    %v244 = vunpack.c.l.b16 %v89
    %v245 = vunpack.c.h.b16 %v89
    %v246 = vunpack.c.l.b16 %v90
    %v247 = vunpack.c.h.b16 %v90
    %v248 = vunpack.c.l.b16 %v91
    %v249 = vunpack.c.h.b16 %v91
    %v250 = vunpack.c.l.b16 %v92
    %v251 = vunpack.c.h.b16 %v92
    %v252 = vunpack.c.l.b16 %v93
    %v253 = vunpack.c.h.b16 %v93
    %v254 = vunpack.c.l.b16 %v94
    %v255 = vunpack.c.h.b16 %v94
    %v256 = vunpack.c.l.b16 %v95
    %v257 = vunpack.c.h.b16 %v95
    %v258 = vunpack.c.l.b16 %v96
    %v259 = vunpack.c.h.b16 %v96
    %v260 = vunpack.c.l.b16 %v97
    %v261 = vunpack.c.h.b16 %v97
    %v262 = vunpack.c.l.b16 %v98
    %v263 = vunpack.c.h.b16 %v98
    %v264 = vunpack.c.l.b16 %v99
    %v265 = vunpack.c.h.b16 %v99
    %v266 = vunpack.c.l.b16 %v100
    %v267 = vunpack.c.h.b16 %v100
    %v268 = vunpack.c.l.b16 %v101
    %v269 = vunpack.c.h.b16 %v101
    %v270 = vunpack.c.l.b16 %v102
    %v271 = vunpack.c.h.b16 %v102
    %v272 = vunpack.c.l.b16 %v103
    %v273 = vunpack.c.h.b16 %v103
    %v274 = vunpack.c.l.b16 %v104
    %v275 = vunpack.c.h.b16 %v104
    %v276 = vunpack.c.l.b16 %v105
    %v277 = vunpack.c.h.b16 %v105
    %v278 = vunpack.c.l.b16 %v106
    %v279 = vunpack.c.h.b16 %v106
    %v280 = vunpack.c.l.b16 %v107
    %v281 = vunpack.c.h.b16 %v107
    %v282 = vunpack.c.l.b16 %v108
    %v283 = vunpack.c.h.b16 %v108
    %v284 = vunpack.c.l.b16 %v109
    %v285 = vunpack.c.h.b16 %v109
    %v286 = vunpack.c.l.b16 %v110
    %v287 = vunpack.c.h.b16 %v110
    %v288 = vunpack.c.l.b16 %v111
    %v289 = vunpack.c.h.b16 %v111
    %v290 = vunpack.c.l.b16 %v112
    %v291 = vunpack.c.h.b16 %v112
    %v292 = vunpack.c.l.b16 %v113
    %v293 = vunpack.c.h.b16 %v113
    %v294 = vunpack.c.l.b16 %v114
    %v295 = vunpack.c.h.b16 %v114
    %v296 = vunpack.c.l.b16 %v115
    %v297 = vunpack.c.h.b16 %v115
    %v298 = vunpack.c.l.b16 %v116
    %v299 = vunpack.c.h.b16 %v116
    %v300 = vunpack.c.l.b16 %v117
    %v301 = vunpack.c.h.b16 %v117
    %v302 = vunpack.c.l.b16 %v118
    %v303 = vunpack.c.h.b16 %v118
    %v304 = vunpack.c.l.b16 %v119
    %v305 = vunpack.c.h.b16 %v119
    %v306 = vunpack.c.l.b16 %v120
    %v307 = vunpack.c.h.b16 %v120
    %v308 = vunpack.c.l.b16 %v121
    %v309 = vunpack.c.h.b16 %v121
    %v310 = vunpack.c.l.b16 %v122
    %v311 = vunpack.c.h.b16 %v122
    %v312 = vunpack.c.l.b16 %v123
    %v313 = vunpack.c.h.b16 %v123
    %v314 = vunpack.c.l.b16 %v124
    %v315 = vunpack.c.h.b16 %v124
    %v316 = vunpack.c.l.b16 %v125
    %v317 = vunpack.c.h.b16 %v125
    %v318 = vunpack.c.l.b16 %v126
    %v319 = vunpack.c.h.b16 %v126
    %v320 = vunpack.c.l.b16 %v127
    %v321 = vunpack.c.h.b16 %v127
    %v322 = vunpack.c.l.b16 %v128
    %v323 = vunpack.c.h.b16 %v128
    %v324 = vunpack.c.l.b16 %v129
    %v325 = vunpack.c.h.b16 %v129
    %v326 = vunpack.c.l.b16 %v130
    %v327 = vunpack.c.h.b16 %v130
    %v328 = vunpack.c.l.b16 %v131
    %v329 = vunpack.c.h.b16 %v131
    %v330 = vunpack.c.l.b16 %v132
    %v331 = vunpack.c.h.b16 %v132
    %v332 = vunpack.c.l.b16 %v133
    %v333 = vunpack.c.h.b16 %v133
    %v334 = vunpack.c.l.b16 %v134
    %v335 = vunpack.c.h.b16 %v134
    %v336 = vunpack.c.l.b16 %v135
    %v337 = vunpack.c.h.b16 %v135
    %v338 = vunpack.c.l.b16 %v136
    %v339 = vunpack.c.h.b16 %v136
    %v340 = vunpack.c.l.b16 %v137
    %v341 = vunpack.c.h.b16 %v137
    %v342 = vunpack.c.l.b16 %v138
    %v343 = vunpack.c.h.b16 %v138
    %v344 = vunpack.c.l.b16 %v139
    %v345 = vunpack.c.h.b16 %v139
    %v346 = vunpack.c.l.b16 %v140
    %v347 = vunpack.c.h.b16 %v140
    %v348 = vunpack.c.l.b16 %v141
    %v349 = vunpack.c.h.b16 %v141
    %v350 = vunpack.c.l.b16 %v142
    %v351 = vunpack.c.h.b16 %v142
    %v352 = vunpack.c.l.b16 %v143
    %v353 = vunpack.c.h.b16 %v143
    %v354 = vunpack.c.l.b16 %v144
    %v355 = vunpack.c.h.b16 %v144
    %v356 = vunpack.c.l.b16 %v145
    %v357 = vunpack.c.h.b16 %v145
    %v358 = vunpack.c.l.b16 %v146
    %v359 = vunpack.c.h.b16 %v146
    %v360 = vunpack.c.l.b16 %v147
    %v361 = vunpack.c.h.b16 %v147
    %v362 = vpack.c.b16 %v238, %v234
    %v363 = vpack.c.b16 %v239, %v235
    %v364 = vpack.c.b16 %v240, %v236
    %v365 = vpack.c.b16 %v241, %v237
    %v366 = vpack.c.b16 %v246, %v242
    %v367 = vpack.c.b16 %v247, %v243
    %v368 = vpack.c.b16 %v248, %v244
    %v369 = vpack.c.b16 %v249, %v245
    %v370 = vpack.c.b16 %v254, %v250
    %v371 = vpack.c.b16 %v255, %v251
    %v372 = vpack.c.b16 %v256, %v252
    %v373 = vpack.c.b16 %v257, %v253
    %v374 = vpack.c.b16 %v262, %v258
    %v375 = vpack.c.b16 %v263, %v259
    %v376 = vpack.c.b16 %v264, %v260
    %v377 = vpack.c.b16 %v265, %v261
    %v378 = vpack.c.b16 %v270, %v266
    %v379 = vpack.c.b16 %v271, %v267
    %v380 = vpack.c.b16 %v272, %v268
    %v381 = vpack.c.b16 %v273, %v269
    %v382 = vpack.c.b16 %v278, %v274
    %v383 = vpack.c.b16 %v279, %v275
    %v384 = vpack.c.b16 %v280, %v276
    %v385 = vpack.c.b16 %v281, %v277
    %v386 = vpack.c.b16 %v286, %v282
    %v387 = vpack.c.b16 %v287, %v283
    %v388 = vpack.c.b16 %v288, %v284
    %v389 = vpack.c.b16 %v289, %v285
    %v390 = vpack.c.b16 %v294, %v290
    %v391 = vpack.c.b16 %v295, %v291
    %v392 = vpack.c.b16 %v296, %v292
    %v393 = vpack.c.b16 %v297, %v293
    %v394 = vpack.c.b16 %v302, %v298
    %v395 = vpack.c.b16 %v303, %v299
    %v396 = vpack.c.b16 %v304, %v300
    %v397 = vpack.c.b16 %v305, %v301
    %v398 = vpack.c.b16 %v310, %v306
    %v399 = vpack.c.b16 %v311, %v307
    %v400 = vpack.c.b16 %v312, %v308
    %v401 = vpack.c.b16 %v313, %v309
    %v402 = vpack.c.b16 %v318, %v314
    %v403 = vpack.c.b16 %v319, %v315
    %v404 = vpack.c.b16 %v320, %v316
    %v405 = vpack.c.b16 %v321, %v317
    %v406 = vpack.c.b16 %v326, %v322
    %v407 = vpack.c.b16 %v327, %v323
    %v408 = vpack.c.b16 %v328, %v324
    %v409 = vpack.c.b16 %v329, %v325
    %v410 = vpack.c.b16 %v334, %v330
    %v411 = vpack.c.b16 %v335, %v331
    %v412 = vpack.c.b16 %v336, %v332
    %v413 = vpack.c.b16 %v337, %v333
    %v414 = vpack.c.b16 %v342, %v338
    %v415 = vpack.c.b16 %v343, %v339
    %v416 = vpack.c.b16 %v344, %v340
    %v417 = vpack.c.b16 %v345, %v341
    %v418 = vpack.c.b16 %v350, %v346
    %v419 = vpack.c.b16 %v351, %v347
    %v420 = vpack.c.b16 %v352, %v348
    %v421 = vpack.c.b16 %v353, %v349
    %v422 = vpack.c.b16 %v358, %v354
    %v423 = vpack.c.b16 %v359, %v355
    %v424 = vpack.c.b16 %v360, %v356
    %v425 = vpack.c.b16 %v361, %v357
    %490 = vmatprep.subr.bf16.mxu0 %v363
    %491 = vmatpush1.bf16.msra.mxu0 %v362
    %492 = vmatprep.subr.bf16.mxu0 %v367
    %493 = vmatpush1.bf16.msra.mxu0 %v366
    %494 = vmatprep.subr.bf16.mxu0 %v371
    %495 = vmatpush1.bf16.msra.mxu0 %v370
    %496 = vmatprep.subr.bf16.mxu0 %v375
    %497 = vmatpush1.bf16.msra.mxu0 %v374
    %498 = vmatprep.subr.bf16.mxu0 %v379
    %499 = vmatpush1.bf16.msra.mxu0 %v378
    %500 = vmatprep.subr.bf16.mxu0 %v383
    %501 = vmatpush1.bf16.msra.mxu0 %v382
    %502 = vmatprep.subr.bf16.mxu0 %v387
    %503 = vmatpush1.bf16.msra.mxu0 %v386
    %504 = vmatprep.subr.bf16.mxu0 %v391
    %505 = vmatpush1.bf16.msra.mxu0 %v390
    %506 = vmatprep.subr.bf16.mxu0 %v395
    %507 = vmatpush1.bf16.msra.mxu0 %v394
    %508 = vmatprep.subr.bf16.mxu0 %v399
    %509 = vmatpush1.bf16.msra.mxu0 %v398
    %510 = vmatprep.subr.bf16.mxu0 %v403
    %511 = vmatpush1.bf16.msra.mxu0 %v402
    %512 = vmatprep.subr.bf16.mxu0 %v407
    %513 = vmatpush1.bf16.msra.mxu0 %v406
    %514 = vmatprep.subr.bf16.mxu0 %v411
    %515 = vmatpush1.bf16.msra.mxu0 %v410
    %516 = vmatprep.subr.bf16.mxu0 %v415
    %517 = vmatpush1.bf16.msra.mxu0 %v414
    %518 = vmatprep.subr.bf16.mxu0 %v419
    %519 = vmatpush1.bf16.msra.mxu0 %v418
    %520 = vmatprep.subr.bf16.mxu0 %v423
    %521 = vmatpush1.bf16.msra.mxu0 %v422
    %522 = vmatprep.mubr.bf16.mxu0 %v83
    %523 = vmatmul.mubr.bf16.gmra.mrb[0].mxu0 %v82
    %v524 = vpop.f32.mrb[0].mxu0
    %v525 = vadd.f32 %v153, %v524
    %v526 = vpop.f32.mrb[0].mxu0
    %v527 = vadd.f32 %v157, %v526
    %v528 = vpop.f32.mrb[0].mxu0
    %v529 = vpop.f32.mrb[0].mxu0
    %530 = vdwg.mxu0
    %531 = vmatprep.subr.bf16.mxu0 %v365
    %532 = vmatpush1.bf16.msra.mxu0 %v364
    %533 = vmatprep.subr.bf16.mxu0 %v369
    %534 = vmatpush1.bf16.msra.mxu0 %v368
    %535 = vmatprep.subr.bf16.mxu0 %v373
    %536 = vmatpush1.bf16.msra.mxu0 %v372
    %537 = vmatprep.subr.bf16.mxu0 %v377
    %538 = vmatpush1.bf16.msra.mxu0 %v376
    %539 = vmatprep.subr.bf16.mxu0 %v381
    %540 = vmatpush1.bf16.msra.mxu0 %v380
    %541 = vmatprep.subr.bf16.mxu0 %v385
    %542 = vmatpush1.bf16.msra.mxu0 %v384
    %543 = vmatprep.subr.bf16.mxu0 %v389
    %544 = vmatpush1.bf16.msra.mxu0 %v388
    %545 = vmatprep.subr.bf16.mxu0 %v393
    %546 = vmatpush1.bf16.msra.mxu0 %v392
    %547 = vmatprep.subr.bf16.mxu0 %v397
    %548 = vmatpush1.bf16.msra.mxu0 %v396
    %549 = vmatprep.subr.bf16.mxu0 %v401
    %550 = vmatpush1.bf16.msra.mxu0 %v400
    %551 = vmatprep.subr.bf16.mxu0 %v405
    %552 = vmatpush1.bf16.msra.mxu0 %v404
    %553 = vmatprep.subr.bf16.mxu0 %v409
    %554 = vmatpush1.bf16.msra.mxu0 %v408
    %555 = vmatprep.subr.bf16.mxu0 %v413
    %556 = vmatpush1.bf16.msra.mxu0 %v412
    %557 = vmatprep.subr.bf16.mxu0 %v417
    %558 = vmatpush1.bf16.msra.mxu0 %v416
    %559 = vmatprep.subr.bf16.mxu0 %v421
    %560 = vmatpush1.bf16.msra.mxu0 %v420
    %561 = vmatprep.subr.bf16.mxu0 %v425
    %562 = vmatpush1.bf16.msra.mxu0 %v424
    %563 = vmatprep.mubr.bf16.mxu0 %v83
    %564 = vmatmul.mubr.bf16.gmra.mrb[0].mxu0 %v82
    %v565 = vpop.f32.mrb[0].mxu0
    %v566 = vadd.f32 %v161, %v565
    %v567 = vpop.f32.mrb[0].mxu0
    %v568 = vadd.f32 %v165, %v567
    %v569 = vpop.f32.mrb[0].mxu0
    %v570 = vpop.f32.mrb[0].mxu0
    %571 = vdwg.mxu0
    %v572 = vpack.c.bf16 %v525, %v525
    %v573 = vpack.c.bf16 %v527, %v527
    %v574 = vpack.c.bf16 %v566, %v566
    %v575 = vpack.c.bf16 %v568, %v568
    %v576 = vld [vmem:[#allocation7] sm:$0xff]
    %v577 = vld [vmem:[#allocation7 + $0x8] sm:$0xff]
    %v578 = vld [vmem:[#allocation7 + $0x10] sm:$0xff]
    %v579 = vld [vmem:[#allocation7 + $0x18] sm:$0xff]
    %v580 = vld [vmem:[#allocation7 + $0x20] sm:$0xff]
    %v581 = vld [vmem:[#allocation7 + $0x28] sm:$0xff]
    %v582 = vld [vmem:[#allocation7 + $0x30] sm:$0xff]
    %v583 = vld [vmem:[#allocation7 + $0x38] sm:$0xff]
    %v584 = vld [vmem:[#allocation7 + $0x40] sm:$0xff]
    %v585 = vld [vmem:[#allocation7 + $0x48] sm:$0xff]
    %v586 = vld [vmem:[#allocation7 + $0x50] sm:$0xff]
    %v587 = vld [vmem:[#allocation7 + $0x58] sm:$0xff]
    %v588 = vld [vmem:[#allocation7 + $0x60] sm:$0xff]
    %v589 = vld [vmem:[#allocation7 + $0x68] sm:$0xff]
    %v590 = vld [vmem:[#allocation7 + $0x70] sm:$0xff]
    %v591 = vld [vmem:[#allocation7 + $0x78] sm:$0xff]
    %v592 = vld [vmem:[#allocation7 + $0x80] sm:$0xff]
    %v593 = vld [vmem:[#allocation7 + $0x88] sm:$0xff]
    %v594 = vld [vmem:[#allocation7 + $0x90] sm:$0xff]
    %v595 = vld [vmem:[#allocation7 + $0x98] sm:$0xff]
    %v596 = vld [vmem:[#allocation7 + $0xa0] sm:$0xff]
    %v597 = vld [vmem:[#allocation7 + $0xa8] sm:$0xff]
    %v598 = vld [vmem:[#allocation7 + $0xb0] sm:$0xff]
    %v599 = vld [vmem:[#allocation7 + $0xb8] sm:$0xff]
    %v600 = vld [vmem:[#allocation7 + $0xc0] sm:$0xff]
    %v601 = vld [vmem:[#allocation7 + $0xc8] sm:$0xff]
    %v602 = vld [vmem:[#allocation7 + $0xd0] sm:$0xff]
    %v603 = vld [vmem:[#allocation7 + $0xd8] sm:$0xff]
    %v604 = vld [vmem:[#allocation7 + $0xe0] sm:$0xff]
    %v605 = vld [vmem:[#allocation7 + $0xe8] sm:$0xff]
    %v606 = vld [vmem:[#allocation7 + $0xf0] sm:$0xff]
    %v607 = vld [vmem:[#allocation7 + $0xf8] sm:$0xff]
    %v608 = vld [vmem:[#allocation7 + $0x100] sm:$0xff]
    %v609 = vld [vmem:[#allocation7 + $0x108] sm:$0xff]
    %v610 = vld [vmem:[#allocation7 + $0x110] sm:$0xff]
    %v611 = vld [vmem:[#allocation7 + $0x118] sm:$0xff]
    %v612 = vld [vmem:[#allocation7 + $0x120] sm:$0xff]
    %v613 = vld [vmem:[#allocation7 + $0x128] sm:$0xff]
    %v614 = vld [vmem:[#allocation7 + $0x130] sm:$0xff]
    %v615 = vld [vmem:[#allocation7 + $0x138] sm:$0xff]
    %v616 = vld [vmem:[#allocation7 + $0x140] sm:$0xff]
    %v617 = vld [vmem:[#allocation7 + $0x148] sm:$0xff]
    %v618 = vld [vmem:[#allocation7 + $0x150] sm:$0xff]
    %v619 = vld [vmem:[#allocation7 + $0x158] sm:$0xff]
    %v620 = vld [vmem:[#allocation7 + $0x160] sm:$0xff]
    %v621 = vld [vmem:[#allocation7 + $0x168] sm:$0xff]
    %v622 = vld [vmem:[#allocation7 + $0x170] sm:$0xff]
    %v623 = vld [vmem:[#allocation7 + $0x178] sm:$0xff]
    %v624 = vld [vmem:[#allocation7 + $0x180] sm:$0xff]
    %v625 = vld [vmem:[#allocation7 + $0x188] sm:$0xff]
    %v626 = vld [vmem:[#allocation7 + $0x190] sm:$0xff]
    %v627 = vld [vmem:[#allocation7 + $0x198] sm:$0xff]
    %v628 = vld [vmem:[#allocation7 + $0x1a0] sm:$0xff]
    %v629 = vld [vmem:[#allocation7 + $0x1a8] sm:$0xff]
    %v630 = vld [vmem:[#allocation7 + $0x1b0] sm:$0xff]
    %v631 = vld [vmem:[#allocation7 + $0x1b8] sm:$0xff]
    %v632 = vld [vmem:[#allocation7 + $0x1c0] sm:$0xff]
    %v633 = vld [vmem:[#allocation7 + $0x1c8] sm:$0xff]
    %v634 = vld [vmem:[#allocation7 + $0x1d0] sm:$0xff]
    %v635 = vld [vmem:[#allocation7 + $0x1d8] sm:$0xff]
    %v636 = vld [vmem:[#allocation7 + $0x1e0] sm:$0xff]
    %v637 = vld [vmem:[#allocation7 + $0x1e8] sm:$0xff]
    %v638 = vld [vmem:[#allocation7 + $0x1f0] sm:$0xff]
    %v639 = vld [vmem:[#allocation7 + $0x1f8] sm:$0xff]
    %v640 = vld [vmem:[#allocation7 + $0x200] sm:$0xff]
    %v641 = vld [vmem:[#allocation7 + $0x208] sm:$0xff]
    %v642 = vld [vmem:[#allocation7 + $0x210] sm:$0xff]
    %v643 = vld [vmem:[#allocation7 + $0x218] sm:$0xff]
    %v644 = vld [vmem:[#allocation7 + $0x220] sm:$0xff]
    %v645 = vld [vmem:[#allocation7 + $0x228] sm:$0xff]
    %v646 = vld [vmem:[#allocation7 + $0x230] sm:$0xff]
    %v647 = vld [vmem:[#allocation7 + $0x238] sm:$0xff]
    %v648 = vld [vmem:[#allocation7 + $0x240] sm:$0xff]
    %v649 = vld [vmem:[#allocation7 + $0x248] sm:$0xff]
    %v650 = vld [vmem:[#allocation7 + $0x250] sm:$0xff]
    %v651 = vld [vmem:[#allocation7 + $0x258] sm:$0xff]
    %v652 = vld [vmem:[#allocation7 + $0x260] sm:$0xff]
    %v653 = vld [vmem:[#allocation7 + $0x268] sm:$0xff]
    %v654 = vld [vmem:[#allocation7 + $0x270] sm:$0xff]
    %v655 = vld [vmem:[#allocation7 + $0x278] sm:$0xff]
    %v656 = vld [vmem:[#allocation7 + $0x280] sm:$0xff]
    %v657 = vld [vmem:[#allocation7 + $0x288] sm:$0xff]
    %v658 = vld [vmem:[#allocation7 + $0x290] sm:$0xff]
    %v659 = vld [vmem:[#allocation7 + $0x298] sm:$0xff]
    %v660 = vld [vmem:[#allocation7 + $0x2a0] sm:$0xff]
    %v661 = vld [vmem:[#allocation7 + $0x2a8] sm:$0xff]
    %v662 = vld [vmem:[#allocation7 + $0x2b0] sm:$0xff]
    %v663 = vld [vmem:[#allocation7 + $0x2b8] sm:$0xff]
    %v664 = vld [vmem:[#allocation7 + $0x2c0] sm:$0xff]
    %v665 = vld [vmem:[#allocation7 + $0x2c8] sm:$0xff]
    %v666 = vld [vmem:[#allocation7 + $0x2d0] sm:$0xff]
    %v667 = vld [vmem:[#allocation7 + $0x2d8] sm:$0xff]
    %v668 = vld [vmem:[#allocation7 + $0x2e0] sm:$0xff]
    %v669 = vld [vmem:[#allocation7 + $0x2e8] sm:$0xff]
    %v670 = vld [vmem:[#allocation7 + $0x2f0] sm:$0xff]
    %v671 = vld [vmem:[#allocation7 + $0x2f8] sm:$0xff]
    %v672 = vld [vmem:[#allocation7 + $0x300] sm:$0xff]
    %v673 = vld [vmem:[#allocation7 + $0x308] sm:$0xff]
    %v674 = vld [vmem:[#allocation7 + $0x310] sm:$0xff]
    %v675 = vld [vmem:[#allocation7 + $0x318] sm:$0xff]
    %v676 = vld [vmem:[#allocation7 + $0x320] sm:$0xff]
    %v677 = vld [vmem:[#allocation7 + $0x328] sm:$0xff]
    %v678 = vld [vmem:[#allocation7 + $0x330] sm:$0xff]
    %v679 = vld [vmem:[#allocation7 + $0x338] sm:$0xff]
    %v680 = vld [vmem:[#allocation7 + $0x340] sm:$0xff]
    %v681 = vld [vmem:[#allocation7 + $0x348] sm:$0xff]
    %v682 = vld [vmem:[#allocation7 + $0x350] sm:$0xff]
    %v683 = vld [vmem:[#allocation7 + $0x358] sm:$0xff]
    %v684 = vld [vmem:[#allocation7 + $0x360] sm:$0xff]
    %v685 = vld [vmem:[#allocation7 + $0x368] sm:$0xff]
    %v686 = vld [vmem:[#allocation7 + $0x370] sm:$0xff]
    %v687 = vld [vmem:[#allocation7 + $0x378] sm:$0xff]
    %v688 = vld [vmem:[#allocation7 + $0x380] sm:$0xff]
    %v689 = vld [vmem:[#allocation7 + $0x388] sm:$0xff]
    %v690 = vld [vmem:[#allocation7 + $0x390] sm:$0xff]
    %v691 = vld [vmem:[#allocation7 + $0x398] sm:$0xff]
    %v692 = vld [vmem:[#allocation7 + $0x3a0] sm:$0xff]
    %v693 = vld [vmem:[#allocation7 + $0x3a8] sm:$0xff]
    %v694 = vld [vmem:[#allocation7 + $0x3b0] sm:$0xff]
    %v695 = vld [vmem:[#allocation7 + $0x3b8] sm:$0xff]
    %v696 = vld [vmem:[#allocation7 + $0x3c0] sm:$0xff]
    %v697 = vld [vmem:[#allocation7 + $0x3c8] sm:$0xff]
    %v698 = vld [vmem:[#allocation7 + $0x3d0] sm:$0xff]
    %v699 = vld [vmem:[#allocation7 + $0x3d8] sm:$0xff]
    %v700 = vld [vmem:[#allocation7 + $0x3e0] sm:$0xff]
    %v701 = vld [vmem:[#allocation7 + $0x3e8] sm:$0xff]
    %v702 = vld [vmem:[#allocation7 + $0x3f0] sm:$0xff]
    %v703 = vld [vmem:[#allocation7 + $0x3f8] sm:$0xff]
    %v704 = vld [vmem:[%s4] sm:$0xf]
    %v706 = vlaneseq
    %v707 = vshrl.u32 %v706, 7
    %v708 = vsub.s32 0, %v707
    %v709 = vrot.slane %v704, %v708
    %v710 = vlaneseq
    %v711 = vshrl.u32 %v710, 7
    %v712 = vsub.s32 1, %v711
    %v713 = vrot.slane %v704, %v712
    %v714 = vlaneseq
    %v715 = vshrl.u32 %v714, 7
    %v716 = vsub.s32 2, %v715
    %v717 = vrot.slane %v704, %v716
    %v718 = vlaneseq
    %v719 = vshrl.u32 %v718, 7
    %v720 = vsub.s32 3, %v719
    %v721 = vrot.slane %v704, %v720
    %v854 = vunpack.c.l.b16 %v576
    %v855 = vunpack.c.h.b16 %v576
    %v856 = vunpack.c.l.b16 %v577
    %v857 = vunpack.c.h.b16 %v577
    %v858 = vunpack.c.l.b16 %v578
    %v859 = vunpack.c.h.b16 %v578
    %v860 = vunpack.c.l.b16 %v579
    %v861 = vunpack.c.h.b16 %v579
    %v862 = vunpack.c.l.b16 %v580
    %v863 = vunpack.c.h.b16 %v580
    %v864 = vunpack.c.l.b16 %v581
    %v865 = vunpack.c.h.b16 %v581
    %v866 = vunpack.c.l.b16 %v582
    %v867 = vunpack.c.h.b16 %v582
    %v868 = vunpack.c.l.b16 %v583
    %v869 = vunpack.c.h.b16 %v583
    %v870 = vunpack.c.l.b16 %v584
    %v871 = vunpack.c.h.b16 %v584
    %v872 = vunpack.c.l.b16 %v585
    %v873 = vunpack.c.h.b16 %v585
    %v874 = vunpack.c.l.b16 %v586
    %v875 = vunpack.c.h.b16 %v586
    %v876 = vunpack.c.l.b16 %v587
    %v877 = vunpack.c.h.b16 %v587
    %v878 = vunpack.c.l.b16 %v588
    %v879 = vunpack.c.h.b16 %v588
    %v880 = vunpack.c.l.b16 %v589
    %v881 = vunpack.c.h.b16 %v589
    %v882 = vunpack.c.l.b16 %v590
    %v883 = vunpack.c.h.b16 %v590
    %v884 = vunpack.c.l.b16 %v591
    %v885 = vunpack.c.h.b16 %v591
    %v886 = vunpack.c.l.b16 %v592
    %v887 = vunpack.c.h.b16 %v592
    %v888 = vunpack.c.l.b16 %v593
    %v889 = vunpack.c.h.b16 %v593
    %v890 = vunpack.c.l.b16 %v594
    %v891 = vunpack.c.h.b16 %v594
    %v892 = vunpack.c.l.b16 %v595
    %v893 = vunpack.c.h.b16 %v595
    %v894 = vunpack.c.l.b16 %v596
    %v895 = vunpack.c.h.b16 %v596
    %v896 = vunpack.c.l.b16 %v597
    %v897 = vunpack.c.h.b16 %v597
    %v898 = vunpack.c.l.b16 %v598
    %v899 = vunpack.c.h.b16 %v598
    %v900 = vunpack.c.l.b16 %v599
    %v901 = vunpack.c.h.b16 %v599
    %v902 = vunpack.c.l.b16 %v600
    %v903 = vunpack.c.h.b16 %v600
    %v904 = vunpack.c.l.b16 %v601
    %v905 = vunpack.c.h.b16 %v601
    %v906 = vunpack.c.l.b16 %v602
    %v907 = vunpack.c.h.b16 %v602
    %v908 = vunpack.c.l.b16 %v603
    %v909 = vunpack.c.h.b16 %v603
    %v910 = vunpack.c.l.b16 %v604
    %v911 = vunpack.c.h.b16 %v604
    %v912 = vunpack.c.l.b16 %v605
    %v913 = vunpack.c.h.b16 %v605
    %v914 = vunpack.c.l.b16 %v606
    %v915 = vunpack.c.h.b16 %v606
    %v916 = vunpack.c.l.b16 %v607
    %v917 = vunpack.c.h.b16 %v607
    %v918 = vunpack.c.l.b16 %v608
    %v919 = vunpack.c.h.b16 %v608
    %v920 = vunpack.c.l.b16 %v609
    %v921 = vunpack.c.h.b16 %v609
    %v922 = vunpack.c.l.b16 %v610
    %v923 = vunpack.c.h.b16 %v610
    %v924 = vunpack.c.l.b16 %v611
    %v925 = vunpack.c.h.b16 %v611
    %v926 = vunpack.c.l.b16 %v612
    %v927 = vunpack.c.h.b16 %v612
    %v928 = vunpack.c.l.b16 %v613
    %v929 = vunpack.c.h.b16 %v613
    %v930 = vunpack.c.l.b16 %v614
    %v931 = vunpack.c.h.b16 %v614
    %v932 = vunpack.c.l.b16 %v615
    %v933 = vunpack.c.h.b16 %v615
    %v934 = vunpack.c.l.b16 %v616
    %v935 = vunpack.c.h.b16 %v616
    %v936 = vunpack.c.l.b16 %v617
    %v937 = vunpack.c.h.b16 %v617
    %v938 = vunpack.c.l.b16 %v618
    %v939 = vunpack.c.h.b16 %v618
    %v940 = vunpack.c.l.b16 %v619
    %v941 = vunpack.c.h.b16 %v619
    %v942 = vunpack.c.l.b16 %v620
    %v943 = vunpack.c.h.b16 %v620
    %v944 = vunpack.c.l.b16 %v621
    %v945 = vunpack.c.h.b16 %v621
    %v946 = vunpack.c.l.b16 %v622
    %v947 = vunpack.c.h.b16 %v622
    %v948 = vunpack.c.l.b16 %v623
    %v949 = vunpack.c.h.b16 %v623
    %v950 = vunpack.c.l.b16 %v624
    %v951 = vunpack.c.h.b16 %v624
    %v952 = vunpack.c.l.b16 %v625
    %v953 = vunpack.c.h.b16 %v625
    %v954 = vunpack.c.l.b16 %v626
    %v955 = vunpack.c.h.b16 %v626
    %v956 = vunpack.c.l.b16 %v627
    %v957 = vunpack.c.h.b16 %v627
    %v958 = vunpack.c.l.b16 %v628
    %v959 = vunpack.c.h.b16 %v628
    %v960 = vunpack.c.l.b16 %v629
    %v961 = vunpack.c.h.b16 %v629
    %v962 = vunpack.c.l.b16 %v630
    %v963 = vunpack.c.h.b16 %v630
    %v964 = vunpack.c.l.b16 %v631
    %v965 = vunpack.c.h.b16 %v631
    %v966 = vunpack.c.l.b16 %v632
    %v967 = vunpack.c.h.b16 %v632
    %v968 = vunpack.c.l.b16 %v633
    %v969 = vunpack.c.h.b16 %v633
    %v970 = vunpack.c.l.b16 %v634
    %v971 = vunpack.c.h.b16 %v634
    %v972 = vunpack.c.l.b16 %v635
    %v973 = vunpack.c.h.b16 %v635
    %v974 = vunpack.c.l.b16 %v636
    %v975 = vunpack.c.h.b16 %v636
    %v976 = vunpack.c.l.b16 %v637
    %v977 = vunpack.c.h.b16 %v637
    %v978 = vunpack.c.l.b16 %v638
    %v979 = vunpack.c.h.b16 %v638
    %v980 = vunpack.c.l.b16 %v639
    %v981 = vunpack.c.h.b16 %v639
    %v982 = vunpack.c.l.b16 %v640
    %v983 = vunpack.c.h.b16 %v640
    %v984 = vunpack.c.l.b16 %v641
    %v985 = vunpack.c.h.b16 %v641
    %v986 = vunpack.c.l.b16 %v642
    %v987 = vunpack.c.h.b16 %v642
    %v988 = vunpack.c.l.b16 %v643
    %v989 = vunpack.c.h.b16 %v643
    %v990 = vunpack.c.l.b16 %v644
    %v991 = vunpack.c.h.b16 %v644
    %v992 = vunpack.c.l.b16 %v645
    %v993 = vunpack.c.h.b16 %v645
    %v994 = vunpack.c.l.b16 %v646
    %v995 = vunpack.c.h.b16 %v646
    %v996 = vunpack.c.l.b16 %v647
    %v997 = vunpack.c.h.b16 %v647
    %v998 = vunpack.c.l.b16 %v648
    %v999 = vunpack.c.h.b16 %v648
    %v1000 = vunpack.c.l.b16 %v649
    %v1001 = vunpack.c.h.b16 %v649
    %v1002 = vunpack.c.l.b16 %v650
    %v1003 = vunpack.c.h.b16 %v650
    %v1004 = vunpack.c.l.b16 %v651
    %v1005 = vunpack.c.h.b16 %v651
    %v1006 = vunpack.c.l.b16 %v652
    %v1007 = vunpack.c.h.b16 %v652
    %v1008 = vunpack.c.l.b16 %v653
    %v1009 = vunpack.c.h.b16 %v653
    %v1010 = vunpack.c.l.b16 %v654
    %v1011 = vunpack.c.h.b16 %v654
    %v1012 = vunpack.c.l.b16 %v655
    %v1013 = vunpack.c.h.b16 %v655
    %v1014 = vunpack.c.l.b16 %v656
    %v1015 = vunpack.c.h.b16 %v656
    %v1016 = vunpack.c.l.b16 %v657
    %v1017 = vunpack.c.h.b16 %v657
    %v1018 = vunpack.c.l.b16 %v658
    %v1019 = vunpack.c.h.b16 %v658
    %v1020 = vunpack.c.l.b16 %v659
    %v1021 = vunpack.c.h.b16 %v659
    %v1022 = vunpack.c.l.b16 %v660
    %v1023 = vunpack.c.h.b16 %v660
    %v1024 = vunpack.c.l.b16 %v661
    %v1025 = vunpack.c.h.b16 %v661
    %v1026 = vunpack.c.l.b16 %v662
    %v1027 = vunpack.c.h.b16 %v662
    %v1028 = vunpack.c.l.b16 %v663
    %v1029 = vunpack.c.h.b16 %v663
    %v1030 = vunpack.c.l.b16 %v664
    %v1031 = vunpack.c.h.b16 %v664
    %v1032 = vunpack.c.l.b16 %v665
    %v1033 = vunpack.c.h.b16 %v665
    %v1034 = vunpack.c.l.b16 %v666
    %v1035 = vunpack.c.h.b16 %v666
    %v1036 = vunpack.c.l.b16 %v667
    %v1037 = vunpack.c.h.b16 %v667
    %v1038 = vunpack.c.l.b16 %v668
    %v1039 = vunpack.c.h.b16 %v668
    %v1040 = vunpack.c.l.b16 %v669
    %v1041 = vunpack.c.h.b16 %v669
    %v1042 = vunpack.c.l.b16 %v670
    %v1043 = vunpack.c.h.b16 %v670
    %v1044 = vunpack.c.l.b16 %v671
    %v1045 = vunpack.c.h.b16 %v671
    %v1046 = vunpack.c.l.b16 %v672
    %v1047 = vunpack.c.h.b16 %v672
    %v1048 = vunpack.c.l.b16 %v673
    %v1049 = vunpack.c.h.b16 %v673
    %v1050 = vunpack.c.l.b16 %v674
    %v1051 = vunpack.c.h.b16 %v674
    %v1052 = vunpack.c.l.b16 %v675
    %v1053 = vunpack.c.h.b16 %v675
    %v1054 = vunpack.c.l.b16 %v676
    %v1055 = vunpack.c.h.b16 %v676
    %v1056 = vunpack.c.l.b16 %v677
    %v1057 = vunpack.c.h.b16 %v677
    %v1058 = vunpack.c.l.b16 %v678
    %v1059 = vunpack.c.h.b16 %v678
    %v1060 = vunpack.c.l.b16 %v679
    %v1061 = vunpack.c.h.b16 %v679
    %v1062 = vunpack.c.l.b16 %v680
    %v1063 = vunpack.c.h.b16 %v680
    %v1064 = vunpack.c.l.b16 %v681
    %v1065 = vunpack.c.h.b16 %v681
    %v1066 = vunpack.c.l.b16 %v682
    %v1067 = vunpack.c.h.b16 %v682
    %v1068 = vunpack.c.l.b16 %v683
    %v1069 = vunpack.c.h.b16 %v683
    %v1070 = vunpack.c.l.b16 %v684
    %v1071 = vunpack.c.h.b16 %v684
    %v1072 = vunpack.c.l.b16 %v685
    %v1073 = vunpack.c.h.b16 %v685
    %v1074 = vunpack.c.l.b16 %v686
    %v1075 = vunpack.c.h.b16 %v686
    %v1076 = vunpack.c.l.b16 %v687
    %v1077 = vunpack.c.h.b16 %v687
    %v1078 = vunpack.c.l.b16 %v688
    %v1079 = vunpack.c.h.b16 %v688
    %v1080 = vunpack.c.l.b16 %v689
    %v1081 = vunpack.c.h.b16 %v689
    %v1082 = vunpack.c.l.b16 %v690
    %v1083 = vunpack.c.h.b16 %v690
    %v1084 = vunpack.c.l.b16 %v691
    %v1085 = vunpack.c.h.b16 %v691
    %v1086 = vunpack.c.l.b16 %v692
    %v1087 = vunpack.c.h.b16 %v692
    %v1088 = vunpack.c.l.b16 %v693
    %v1089 = vunpack.c.h.b16 %v693
    %v1090 = vunpack.c.l.b16 %v694
    %v1091 = vunpack.c.h.b16 %v694
    %v1092 = vunpack.c.l.b16 %v695
    %v1093 = vunpack.c.h.b16 %v695
    %v1094 = vunpack.c.l.b16 %v696
    %v1095 = vunpack.c.h.b16 %v696
    %v1096 = vunpack.c.l.b16 %v697
    %v1097 = vunpack.c.h.b16 %v697
    %v1098 = vunpack.c.l.b16 %v698
    %v1099 = vunpack.c.h.b16 %v698
    %v1100 = vunpack.c.l.b16 %v699
    %v1101 = vunpack.c.h.b16 %v699
    %v1102 = vunpack.c.l.b16 %v700
    %v1103 = vunpack.c.h.b16 %v700
    %v1104 = vunpack.c.l.b16 %v701
    %v1105 = vunpack.c.h.b16 %v701
    %v1106 = vunpack.c.l.b16 %v702
    %v1107 = vunpack.c.h.b16 %v702
    %v1108 = vunpack.c.l.b16 %v703
    %v1109 = vunpack.c.h.b16 %v703
    %v1110 = vpack.c.b16 %v858, %v854
    %v1111 = vpack.c.b16 %v859, %v855
    %v1112 = vpack.c.b16 %v860, %v856
    %v1113 = vpack.c.b16 %v861, %v857
    %v1114 = vpack.c.b16 %v866, %v862
    %v1115 = vpack.c.b16 %v867, %v863
    %v1116 = vpack.c.b16 %v868, %v864
    %v1117 = vpack.c.b16 %v869, %v865
    %v1118 = vpack.c.b16 %v874, %v870
    %v1119 = vpack.c.b16 %v875, %v871
    %v1120 = vpack.c.b16 %v876, %v872
    %v1121 = vpack.c.b16 %v877, %v873
    %v1122 = vpack.c.b16 %v882, %v878
    %v1123 = vpack.c.b16 %v883, %v879
    %v1124 = vpack.c.b16 %v884, %v880
    %v1125 = vpack.c.b16 %v885, %v881
    %v1126 = vpack.c.b16 %v890, %v886
    %v1127 = vpack.c.b16 %v891, %v887
    %v1128 = vpack.c.b16 %v892, %v888
    %v1129 = vpack.c.b16 %v893, %v889
    %v1130 = vpack.c.b16 %v898, %v894
    %v1131 = vpack.c.b16 %v899, %v895
    %v1132 = vpack.c.b16 %v900, %v896
    %v1133 = vpack.c.b16 %v901, %v897
    %v1134 = vpack.c.b16 %v906, %v902
    %v1135 = vpack.c.b16 %v907, %v903
    %v1136 = vpack.c.b16 %v908, %v904
    %v1137 = vpack.c.b16 %v909, %v905
    %v1138 = vpack.c.b16 %v914, %v910
    %v1139 = vpack.c.b16 %v915, %v911
    %v1140 = vpack.c.b16 %v916, %v912
    %v1141 = vpack.c.b16 %v917, %v913
    %v1142 = vpack.c.b16 %v922, %v918
    %v1143 = vpack.c.b16 %v923, %v919
    %v1144 = vpack.c.b16 %v924, %v920
    %v1145 = vpack.c.b16 %v925, %v921
    %v1146 = vpack.c.b16 %v930, %v926
    %v1147 = vpack.c.b16 %v931, %v927
    %v1148 = vpack.c.b16 %v932, %v928
    %v1149 = vpack.c.b16 %v933, %v929
    %v1150 = vpack.c.b16 %v938, %v934
    %v1151 = vpack.c.b16 %v939, %v935
    %v1152 = vpack.c.b16 %v940, %v936
    %v1153 = vpack.c.b16 %v941, %v937
    %v1154 = vpack.c.b16 %v946, %v942
    %v1155 = vpack.c.b16 %v947, %v943
    %v1156 = vpack.c.b16 %v948, %v944
    %v1157 = vpack.c.b16 %v949, %v945
    %v1158 = vpack.c.b16 %v954, %v950
    %v1159 = vpack.c.b16 %v955, %v951
    %v1160 = vpack.c.b16 %v956, %v952
    %v1161 = vpack.c.b16 %v957, %v953
    %v1162 = vpack.c.b16 %v962, %v958
    %v1163 = vpack.c.b16 %v963, %v959
    %v1164 = vpack.c.b16 %v964, %v960
    %v1165 = vpack.c.b16 %v965, %v961
    %v1166 = vpack.c.b16 %v970, %v966
    %v1167 = vpack.c.b16 %v971, %v967
    %v1168 = vpack.c.b16 %v972, %v968
    %v1169 = vpack.c.b16 %v973, %v969
    %v1170 = vpack.c.b16 %v978, %v974
    %v1171 = vpack.c.b16 %v979, %v975
    %v1172 = vpack.c.b16 %v980, %v976
    %v1173 = vpack.c.b16 %v981, %v977
    %v1174 = vpack.c.b16 %v986, %v982
    %v1175 = vpack.c.b16 %v987, %v983
    %v1176 = vpack.c.b16 %v988, %v984
    %v1177 = vpack.c.b16 %v989, %v985
    %v1178 = vpack.c.b16 %v994, %v990
    %v1179 = vpack.c.b16 %v995, %v991
    %v1180 = vpack.c.b16 %v996, %v992
    %v1181 = vpack.c.b16 %v997, %v993
    %v1182 = vpack.c.b16 %v1002, %v998
    %v1183 = vpack.c.b16 %v1003, %v999
    %v1184 = vpack.c.b16 %v1004, %v1000
    %v1185 = vpack.c.b16 %v1005, %v1001
    %v1186 = vpack.c.b16 %v1010, %v1006
    %v1187 = vpack.c.b16 %v1011, %v1007
    %v1188 = vpack.c.b16 %v1012, %v1008
    %v1189 = vpack.c.b16 %v1013, %v1009
    %v1190 = vpack.c.b16 %v1018, %v1014
    %v1191 = vpack.c.b16 %v1019, %v1015
    %v1192 = vpack.c.b16 %v1020, %v1016
    %v1193 = vpack.c.b16 %v1021, %v1017
    %v1194 = vpack.c.b16 %v1026, %v1022
    %v1195 = vpack.c.b16 %v1027, %v1023
    %v1196 = vpack.c.b16 %v1028, %v1024
    %v1197 = vpack.c.b16 %v1029, %v1025
    %v1198 = vpack.c.b16 %v1034, %v1030
    %v1199 = vpack.c.b16 %v1035, %v1031
    %v1200 = vpack.c.b16 %v1036, %v1032
    %v1201 = vpack.c.b16 %v1037, %v1033
    %v1202 = vpack.c.b16 %v1042, %v1038
    %v1203 = vpack.c.b16 %v1043, %v1039
    %v1204 = vpack.c.b16 %v1044, %v1040
    %v1205 = vpack.c.b16 %v1045, %v1041
    %v1206 = vpack.c.b16 %v1050, %v1046
    %v1207 = vpack.c.b16 %v1051, %v1047
    %v1208 = vpack.c.b16 %v1052, %v1048
    %v1209 = vpack.c.b16 %v1053, %v1049
    %v1210 = vpack.c.b16 %v1058, %v1054
    %v1211 = vpack.c.b16 %v1059, %v1055
    %v1212 = vpack.c.b16 %v1060, %v1056
    %v1213 = vpack.c.b16 %v1061, %v1057
    %v1214 = vpack.c.b16 %v1066, %v1062
    %v1215 = vpack.c.b16 %v1067, %v1063
    %v1216 = vpack.c.b16 %v1068, %v1064
    %v1217 = vpack.c.b16 %v1069, %v1065
    %v1218 = vpack.c.b16 %v1074, %v1070
    %v1219 = vpack.c.b16 %v1075, %v1071
    %v1220 = vpack.c.b16 %v1076, %v1072
    %v1221 = vpack.c.b16 %v1077, %v1073
    %v1222 = vpack.c.b16 %v1082, %v1078
    %v1223 = vpack.c.b16 %v1083, %v1079
    %v1224 = vpack.c.b16 %v1084, %v1080
    %v1225 = vpack.c.b16 %v1085, %v1081
    %v1226 = vpack.c.b16 %v1090, %v1086
    %v1227 = vpack.c.b16 %v1091, %v1087
    %v1228 = vpack.c.b16 %v1092, %v1088
    %v1229 = vpack.c.b16 %v1093, %v1089
    %v1230 = vpack.c.b16 %v1098, %v1094
    %v1231 = vpack.c.b16 %v1099, %v1095
    %v1232 = vpack.c.b16 %v1100, %v1096
    %v1233 = vpack.c.b16 %v1101, %v1097
    %v1234 = vpack.c.b16 %v1106, %v1102
    %v1235 = vpack.c.b16 %v1107, %v1103
    %v1236 = vpack.c.b16 %v1108, %v1104
    %v1237 = vpack.c.b16 %v1109, %v1105
    %1366 = vmatprep.subr.bf16.mxu0 %v1111
    %1367 = vmatpush1.bf16.msra.mxu0 %v1110
    %1368 = vmatprep.subr.bf16.mxu0 %v1115
    %1369 = vmatpush1.bf16.msra.mxu0 %v1114
    %1370 = vmatprep.subr.bf16.mxu0 %v1119
    %1371 = vmatpush1.bf16.msra.mxu0 %v1118
    %1372 = vmatprep.subr.bf16.mxu0 %v1123
    %1373 = vmatpush1.bf16.msra.mxu0 %v1122
    %1374 = vmatprep.subr.bf16.mxu0 %v1127
    %1375 = vmatpush1.bf16.msra.mxu0 %v1126
    %1376 = vmatprep.subr.bf16.mxu0 %v1131
    %1377 = vmatpush1.bf16.msra.mxu0 %v1130
    %1378 = vmatprep.subr.bf16.mxu0 %v1135
    %1379 = vmatpush1.bf16.msra.mxu0 %v1134
    %1380 = vmatprep.subr.bf16.mxu0 %v1139
    %1381 = vmatpush1.bf16.msra.mxu0 %v1138
    %1382 = vmatprep.subr.bf16.mxu0 %v1143
    %1383 = vmatpush1.bf16.msra.mxu0 %v1142
    %1384 = vmatprep.subr.bf16.mxu0 %v1147
    %1385 = vmatpush1.bf16.msra.mxu0 %v1146
    %1386 = vmatprep.subr.bf16.mxu0 %v1151
    %1387 = vmatpush1.bf16.msra.mxu0 %v1150
    %1388 = vmatprep.subr.bf16.mxu0 %v1155
    %1389 = vmatpush1.bf16.msra.mxu0 %v1154
    %1390 = vmatprep.subr.bf16.mxu0 %v1159
    %1391 = vmatpush1.bf16.msra.mxu0 %v1158
    %1392 = vmatprep.subr.bf16.mxu0 %v1163
    %1393 = vmatpush1.bf16.msra.mxu0 %v1162
    %1394 = vmatprep.subr.bf16.mxu0 %v1167
    %1395 = vmatpush1.bf16.msra.mxu0 %v1166
    %1396 = vmatprep.subr.bf16.mxu0 %v1171
    %1397 = vmatpush1.bf16.msra.mxu0 %v1170
    %1398 = vmatprep.mubr.bf16.mxu0 %v573
    %1399 = vmatmul.mubr.bf16.gmra.mrb[0].mxu0 %v572
    %v1400 = vpop.f32.mrb[0].mxu0
    %v1401 = vadd.f32 %v709, %v1400
    %v1402 = vpop.f32.mrb[0].mxu0
    %v1403 = vadd.f32 %v713, %v1402
    %v1404 = vpop.f32.mrb[0].mxu0
    %v1405 = vpop.f32.mrb[0].mxu0
    %1406 = vdwg.mxu0
    %1407 = vmatprep.subr.bf16.mxu0 %v1175
    %1408 = vmatpush1.bf16.msra.mxu0 %v1174
    %1409 = vmatprep.subr.bf16.mxu0 %v1179
    %1410 = vmatpush1.bf16.msra.mxu0 %v1178
    %1411 = vmatprep.subr.bf16.mxu0 %v1183
    %1412 = vmatpush1.bf16.msra.mxu0 %v1182
    %1413 = vmatprep.subr.bf16.mxu0 %v1187
    %1414 = vmatpush1.bf16.msra.mxu0 %v1186
    %1415 = vmatprep.subr.bf16.mxu0 %v1191
    %1416 = vmatpush1.bf16.msra.mxu0 %v1190
    %1417 = vmatprep.subr.bf16.mxu0 %v1195
    %1418 = vmatpush1.bf16.msra.mxu0 %v1194
    %1419 = vmatprep.subr.bf16.mxu0 %v1199
    %1420 = vmatpush1.bf16.msra.mxu0 %v1198
    %1421 = vmatprep.subr.bf16.mxu0 %v1203
    %1422 = vmatpush1.bf16.msra.mxu0 %v1202
    %1423 = vmatprep.subr.bf16.mxu0 %v1207
    %1424 = vmatpush1.bf16.msra.mxu0 %v1206
    %1425 = vmatprep.subr.bf16.mxu0 %v1211
    %1426 = vmatpush1.bf16.msra.mxu0 %v1210
    %1427 = vmatprep.subr.bf16.mxu0 %v1215
    %1428 = vmatpush1.bf16.msra.mxu0 %v1214
    %1429 = vmatprep.subr.bf16.mxu0 %v1219
    %1430 = vmatpush1.bf16.msra.mxu0 %v1218
    %1431 = vmatprep.subr.bf16.mxu0 %v1223
    %1432 = vmatpush1.bf16.msra.mxu0 %v1222
    %1433 = vmatprep.subr.bf16.mxu0 %v1227
    %1434 = vmatpush1.bf16.msra.mxu0 %v1226
    %1435 = vmatprep.subr.bf16.mxu0 %v1231
    %1436 = vmatpush1.bf16.msra.mxu0 %v1230
    %1437 = vmatprep.subr.bf16.mxu0 %v1235
    %1438 = vmatpush1.bf16.msra.mxu0 %v1234
    %1439 = vmatprep.mubr.bf16.mxu0 %v575
    %1440 = vmatmul.mubr.bf16.gmra.mrb[0].mxu0 %v574
    %v1441 = vpop.f32.mrb[0].mxu0
    %v1442 = vadd.f32 %v1401, %v1441
    %v1443 = vpop.f32.mrb[0].mxu0
    %v1444 = vadd.f32 %v1403, %v1443
    %v1445 = vpop.f32.mrb[0].mxu0
    %v1446 = vpop.f32.mrb[0].mxu0
    %1447 = vdwg.mxu0
    %1448 = vmatprep.subr.bf16.mxu0 %v1113
    %1449 = vmatpush1.bf16.msra.mxu0 %v1112
    %1450 = vmatprep.subr.bf16.mxu0 %v1117
    %1451 = vmatpush1.bf16.msra.mxu0 %v1116
    %1452 = vmatprep.subr.bf16.mxu0 %v1121
    %1453 = vmatpush1.bf16.msra.mxu0 %v1120
    %1454 = vmatprep.subr.bf16.mxu0 %v1125
    %1455 = vmatpush1.bf16.msra.mxu0 %v1124
    %1456 = vmatprep.subr.bf16.mxu0 %v1129
    %1457 = vmatpush1.bf16.msra.mxu0 %v1128
    %1458 = vmatprep.subr.bf16.mxu0 %v1133
    %1459 = vmatpush1.bf16.msra.mxu0 %v1132
    %1460 = vmatprep.subr.bf16.mxu0 %v1137
    %1461 = vmatpush1.bf16.msra.mxu0 %v1136
    %1462 = vmatprep.subr.bf16.mxu0 %v1141
    %1463 = vmatpush1.bf16.msra.mxu0 %v1140
    %1464 = vmatprep.subr.bf16.mxu0 %v1145
    %1465 = vmatpush1.bf16.msra.mxu0 %v1144
    %1466 = vmatprep.subr.bf16.mxu0 %v1149
    %1467 = vmatpush1.bf16.msra.mxu0 %v1148
    %1468 = vmatprep.subr.bf16.mxu0 %v1153
    %1469 = vmatpush1.bf16.msra.mxu0 %v1152
    %1470 = vmatprep.subr.bf16.mxu0 %v1157
    %1471 = vmatpush1.bf16.msra.mxu0 %v1156
    %1472 = vmatprep.subr.bf16.mxu0 %v1161
    %1473 = vmatpush1.bf16.msra.mxu0 %v1160
    %1474 = vmatprep.subr.bf16.mxu0 %v1165
    %1475 = vmatpush1.bf16.msra.mxu0 %v1164
    %1476 = vmatprep.subr.bf16.mxu0 %v1169
    %1477 = vmatpush1.bf16.msra.mxu0 %v1168
    %1478 = vmatprep.subr.bf16.mxu0 %v1173
    %1479 = vmatpush1.bf16.msra.mxu0 %v1172
    %1480 = vmatprep.mubr.bf16.mxu0 %v573
    %1481 = vmatmul.mubr.bf16.gmra.mrb[0].mxu0 %v572
    %v1482 = vpop.f32.mrb[0].mxu0
    %v1483 = vadd.f32 %v717, %v1482
    %v1484 = vpop.f32.mrb[0].mxu0
    %v1485 = vadd.f32 %v721, %v1484
    %v1486 = vpop.f32.mrb[0].mxu0
    %v1487 = vpop.f32.mrb[0].mxu0
    %1488 = vdwg.mxu0
    %1489 = vmatprep.subr.bf16.mxu0 %v1177
    %1490 = vmatpush1.bf16.msra.mxu0 %v1176
    %1491 = vmatprep.subr.bf16.mxu0 %v1181
    %1492 = vmatpush1.bf16.msra.mxu0 %v1180
    %1493 = vmatprep.subr.bf16.mxu0 %v1185
    %1494 = vmatpush1.bf16.msra.mxu0 %v1184
    %1495 = vmatprep.subr.bf16.mxu0 %v1189
    %1496 = vmatpush1.bf16.msra.mxu0 %v1188
    %1497 = vmatprep.subr.bf16.mxu0 %v1193
    %1498 = vmatpush1.bf16.msra.mxu0 %v1192
    %1499 = vmatprep.subr.bf16.mxu0 %v1197
    %1500 = vmatpush1.bf16.msra.mxu0 %v1196
    %1501 = vmatprep.subr.bf16.mxu0 %v1201
    %1502 = vmatpush1.bf16.msra.mxu0 %v1200
    %1503 = vmatprep.subr.bf16.mxu0 %v1205
    %1504 = vmatpush1.bf16.msra.mxu0 %v1204
    %1505 = vmatprep.subr.bf16.mxu0 %v1209
    %1506 = vmatpush1.bf16.msra.mxu0 %v1208
    %1507 = vmatprep.subr.bf16.mxu0 %v1213
    %1508 = vmatpush1.bf16.msra.mxu0 %v1212
    %1509 = vmatprep.subr.bf16.mxu0 %v1217
    %1510 = vmatpush1.bf16.msra.mxu0 %v1216
    %1511 = vmatprep.subr.bf16.mxu0 %v1221
    %1512 = vmatpush1.bf16.msra.mxu0 %v1220
    %1513 = vmatprep.subr.bf16.mxu0 %v1225
    %1514 = vmatpush1.bf16.msra.mxu0 %v1224
    %1515 = vmatprep.subr.bf16.mxu0 %v1229
    %1516 = vmatpush1.bf16.msra.mxu0 %v1228
    %1517 = vmatprep.subr.bf16.mxu0 %v1233
    %1518 = vmatpush1.bf16.msra.mxu0 %v1232
    %1519 = vmatprep.subr.bf16.mxu0 %v1237
    %1520 = vmatpush1.bf16.msra.mxu0 %v1236
    %1521 = vmatprep.mubr.bf16.mxu0 %v575
    %1522 = vmatmul.mubr.bf16.gmra.mrb[0].mxu0 %v574
    %v1523 = vpop.f32.mrb[0].mxu0
    %v1524 = vadd.f32 %v1483, %v1523
    %v1525 = vpop.f32.mrb[0].mxu0
    %v1526 = vadd.f32 %v1485, %v1525
    %v1527 = vpop.f32.mrb[0].mxu0
    %v1528 = vpop.f32.mrb[0].mxu0
    %1529 = vdwg.mxu0
    %vm1530 = vcmp.ge.f32.partialorder %v1442, 0.0
    %vm1531 = vcmp.ge.f32.partialorder %v1444, 0.0
    %vm1532 = vcmp.ge.f32.partialorder %v1524, 0.0
    %vm1533 = vcmp.ge.f32.partialorder %v1526, 0.0
    %v1534 = vmul.f32 %v1442, 0.3
    %v1535 = vmul.f32 %v1444, 0.3
    %v1536 = vmul.f32 %v1524, 0.3
    %v1537 = vmul.f32 %v1526, 0.3
    %v1538 = vsel %vm1530, %v1442, %v1534
    %v1539 = vsel %vm1531, %v1444, %v1535
    %v1540 = vsel %vm1532, %v1524, %v1536
    %v1541 = vsel %vm1533, %v1526, %v1537
    %v1542 = vpack.c.bf16 %v1538, %v1538
    %v1543 = vpack.c.bf16 %v1539, %v1539
    %v1544 = vpack.c.bf16 %v1540, %v1540
    %v1545 = vpack.c.bf16 %v1541, %v1541
    %v1546 = vld [vmem:[#allocation8] sm:$0xff]
    %v1547 = vld [vmem:[#allocation8 + $0x8] sm:$0xff]
    %v1548 = vld [vmem:[#allocation8 + $0x10] sm:$0xff]
    %v1549 = vld [vmem:[#allocation8 + $0x18] sm:$0xff]
    %v1550 = vld [vmem:[#allocation8 + $0x20] sm:$0xff]
    %v1551 = vld [vmem:[#allocation8 + $0x28] sm:$0xff]
    %v1552 = vld [vmem:[#allocation8 + $0x30] sm:$0xff]
    %v1553 = vld [vmem:[#allocation8 + $0x38] sm:$0xff]
    %v1554 = vld [vmem:[#allocation8 + $0x40] sm:$0xff]
    %v1555 = vld [vmem:[#allocation8 + $0x48] sm:$0xff]
    %v1556 = vld [vmem:[#allocation8 + $0x50] sm:$0xff]
    %v1557 = vld [vmem:[#allocation8 + $0x58] sm:$0xff]
    %v1558 = vld [vmem:[#allocation8 + $0x60] sm:$0xff]
    %v1559 = vld [vmem:[#allocation8 + $0x68] sm:$0xff]
    %v1560 = vld [vmem:[#allocation8 + $0x70] sm:$0xff]
    %v1561 = vld [vmem:[#allocation8 + $0x78] sm:$0xff]
    %v1562 = vld [vmem:[#allocation8 + $0x80] sm:$0xff]
    %v1563 = vld [vmem:[#allocation8 + $0x88] sm:$0xff]
    %v1564 = vld [vmem:[#allocation8 + $0x90] sm:$0xff]
    %v1565 = vld [vmem:[#allocation8 + $0x98] sm:$0xff]
    %v1566 = vld [vmem:[#allocation8 + $0xa0] sm:$0xff]
    %v1567 = vld [vmem:[#allocation8 + $0xa8] sm:$0xff]
    %v1568 = vld [vmem:[#allocation8 + $0xb0] sm:$0xff]
    %v1569 = vld [vmem:[#allocation8 + $0xb8] sm:$0xff]
    %v1570 = vld [vmem:[#allocation8 + $0xc0] sm:$0xff]
    %v1571 = vld [vmem:[#allocation8 + $0xc8] sm:$0xff]
    %v1572 = vld [vmem:[#allocation8 + $0xd0] sm:$0xff]
    %v1573 = vld [vmem:[#allocation8 + $0xd8] sm:$0xff]
    %v1574 = vld [vmem:[#allocation8 + $0xe0] sm:$0xff]
    %v1575 = vld [vmem:[#allocation8 + $0xe8] sm:$0xff]
    %v1576 = vld [vmem:[#allocation8 + $0xf0] sm:$0xff]
    %v1577 = vld [vmem:[#allocation8 + $0xf8] sm:$0xff]
    %v1578 = vld [vmem:[#allocation8 + $0x100] sm:$0xff]
    %v1579 = vld [vmem:[#allocation8 + $0x108] sm:$0xff]
    %v1580 = vld [vmem:[#allocation8 + $0x110] sm:$0xff]
    %v1581 = vld [vmem:[#allocation8 + $0x118] sm:$0xff]
    %v1582 = vld [vmem:[#allocation8 + $0x120] sm:$0xff]
    %v1583 = vld [vmem:[#allocation8 + $0x128] sm:$0xff]
    %v1584 = vld [vmem:[#allocation8 + $0x130] sm:$0xff]
    %v1585 = vld [vmem:[#allocation8 + $0x138] sm:$0xff]
    %v1586 = vld [vmem:[#allocation8 + $0x140] sm:$0xff]
    %v1587 = vld [vmem:[#allocation8 + $0x148] sm:$0xff]
    %v1588 = vld [vmem:[#allocation8 + $0x150] sm:$0xff]
    %v1589 = vld [vmem:[#allocation8 + $0x158] sm:$0xff]
    %v1590 = vld [vmem:[#allocation8 + $0x160] sm:$0xff]
    %v1591 = vld [vmem:[#allocation8 + $0x168] sm:$0xff]
    %v1592 = vld [vmem:[#allocation8 + $0x170] sm:$0xff]
    %v1593 = vld [vmem:[#allocation8 + $0x178] sm:$0xff]
    %v1594 = vld [vmem:[#allocation8 + $0x180] sm:$0xff]
    %v1595 = vld [vmem:[#allocation8 + $0x188] sm:$0xff]
    %v1596 = vld [vmem:[#allocation8 + $0x190] sm:$0xff]
    %v1597 = vld [vmem:[#allocation8 + $0x198] sm:$0xff]
    %v1598 = vld [vmem:[#allocation8 + $0x1a0] sm:$0xff]
    %v1599 = vld [vmem:[#allocation8 + $0x1a8] sm:$0xff]
    %v1600 = vld [vmem:[#allocation8 + $0x1b0] sm:$0xff]
    %v1601 = vld [vmem:[#allocation8 + $0x1b8] sm:$0xff]
    %v1602 = vld [vmem:[#allocation8 + $0x1c0] sm:$0xff]
    %v1603 = vld [vmem:[#allocation8 + $0x1c8] sm:$0xff]
    %v1604 = vld [vmem:[#allocation8 + $0x1d0] sm:$0xff]
    %v1605 = vld [vmem:[#allocation8 + $0x1d8] sm:$0xff]
    %v1606 = vld [vmem:[#allocation8 + $0x1e0] sm:$0xff]
    %v1607 = vld [vmem:[#allocation8 + $0x1e8] sm:$0xff]
    %v1608 = vld [vmem:[#allocation8 + $0x1f0] sm:$0xff]
    %v1609 = vld [vmem:[#allocation8 + $0x1f8] sm:$0xff]
    %v1610 = vld [vmem:[%s6] sm:$0x3]
    %v1612 = vlaneseq
    %v1613 = vshrl.u32 %v1612, 7
    %v1614 = vsub.s32 0, %v1613
    %v1615 = vrot.slane %v1610, %v1614
    %v1616 = vlaneseq
    %v1617 = vshrl.u32 %v1616, 7
    %v1618 = vsub.s32 1, %v1617
    %v1619 = vrot.slane %v1610, %v1618
    %v1686 = vunpack.c.l.b16 %v1546
    %v1687 = vunpack.c.h.b16 %v1546
    %v1688 = vunpack.c.l.b16 %v1547
    %v1689 = vunpack.c.h.b16 %v1547
    %v1690 = vunpack.c.l.b16 %v1548
    %v1691 = vunpack.c.h.b16 %v1548
    %v1692 = vunpack.c.l.b16 %v1549
    %v1693 = vunpack.c.h.b16 %v1549
    %v1694 = vunpack.c.l.b16 %v1550
    %v1695 = vunpack.c.h.b16 %v1550
    %v1696 = vunpack.c.l.b16 %v1551
    %v1697 = vunpack.c.h.b16 %v1551
    %v1698 = vunpack.c.l.b16 %v1552
    %v1699 = vunpack.c.h.b16 %v1552
    %v1700 = vunpack.c.l.b16 %v1553
    %v1701 = vunpack.c.h.b16 %v1553
    %v1702 = vunpack.c.l.b16 %v1554
    %v1703 = vunpack.c.h.b16 %v1554
    %v1704 = vunpack.c.l.b16 %v1555
    %v1705 = vunpack.c.h.b16 %v1555
    %v1706 = vunpack.c.l.b16 %v1556
    %v1707 = vunpack.c.h.b16 %v1556
    %v1708 = vunpack.c.l.b16 %v1557
    %v1709 = vunpack.c.h.b16 %v1557
    %v1710 = vunpack.c.l.b16 %v1558
    %v1711 = vunpack.c.h.b16 %v1558
    %v1712 = vunpack.c.l.b16 %v1559
    %v1713 = vunpack.c.h.b16 %v1559
    %v1714 = vunpack.c.l.b16 %v1560
    %v1715 = vunpack.c.h.b16 %v1560
    %v1716 = vunpack.c.l.b16 %v1561
    %v1717 = vunpack.c.h.b16 %v1561
    %v1718 = vunpack.c.l.b16 %v1562
    %v1719 = vunpack.c.h.b16 %v1562
    %v1720 = vunpack.c.l.b16 %v1563
    %v1721 = vunpack.c.h.b16 %v1563
    %v1722 = vunpack.c.l.b16 %v1564
    %v1723 = vunpack.c.h.b16 %v1564
    %v1724 = vunpack.c.l.b16 %v1565
    %v1725 = vunpack.c.h.b16 %v1565
    %v1726 = vunpack.c.l.b16 %v1566
    %v1727 = vunpack.c.h.b16 %v1566
    %v1728 = vunpack.c.l.b16 %v1567
    %v1729 = vunpack.c.h.b16 %v1567
    %v1730 = vunpack.c.l.b16 %v1568
    %v1731 = vunpack.c.h.b16 %v1568
    %v1732 = vunpack.c.l.b16 %v1569
    %v1733 = vunpack.c.h.b16 %v1569
    %v1734 = vunpack.c.l.b16 %v1570
    %v1735 = vunpack.c.h.b16 %v1570
    %v1736 = vunpack.c.l.b16 %v1571
    %v1737 = vunpack.c.h.b16 %v1571
    %v1738 = vunpack.c.l.b16 %v1572
    %v1739 = vunpack.c.h.b16 %v1572
    %v1740 = vunpack.c.l.b16 %v1573
    %v1741 = vunpack.c.h.b16 %v1573
    %v1742 = vunpack.c.l.b16 %v1574
    %v1743 = vunpack.c.h.b16 %v1574
    %v1744 = vunpack.c.l.b16 %v1575
    %v1745 = vunpack.c.h.b16 %v1575
    %v1746 = vunpack.c.l.b16 %v1576
    %v1747 = vunpack.c.h.b16 %v1576
    %v1748 = vunpack.c.l.b16 %v1577
    %v1749 = vunpack.c.h.b16 %v1577
    %v1750 = vunpack.c.l.b16 %v1578
    %v1751 = vunpack.c.h.b16 %v1578
    %v1752 = vunpack.c.l.b16 %v1579
    %v1753 = vunpack.c.h.b16 %v1579
    %v1754 = vunpack.c.l.b16 %v1580
    %v1755 = vunpack.c.h.b16 %v1580
    %v1756 = vunpack.c.l.b16 %v1581
    %v1757 = vunpack.c.h.b16 %v1581
    %v1758 = vunpack.c.l.b16 %v1582
    %v1759 = vunpack.c.h.b16 %v1582
    %v1760 = vunpack.c.l.b16 %v1583
    %v1761 = vunpack.c.h.b16 %v1583
    %v1762 = vunpack.c.l.b16 %v1584
    %v1763 = vunpack.c.h.b16 %v1584
    %v1764 = vunpack.c.l.b16 %v1585
    %v1765 = vunpack.c.h.b16 %v1585
    %v1766 = vunpack.c.l.b16 %v1586
    %v1767 = vunpack.c.h.b16 %v1586
    %v1768 = vunpack.c.l.b16 %v1587
    %v1769 = vunpack.c.h.b16 %v1587
    %v1770 = vunpack.c.l.b16 %v1588
    %v1771 = vunpack.c.h.b16 %v1588
    %v1772 = vunpack.c.l.b16 %v1589
    %v1773 = vunpack.c.h.b16 %v1589
    %v1774 = vunpack.c.l.b16 %v1590
    %v1775 = vunpack.c.h.b16 %v1590
    %v1776 = vunpack.c.l.b16 %v1591
    %v1777 = vunpack.c.h.b16 %v1591
    %v1778 = vunpack.c.l.b16 %v1592
    %v1779 = vunpack.c.h.b16 %v1592
    %v1780 = vunpack.c.l.b16 %v1593
    %v1781 = vunpack.c.h.b16 %v1593
    %v1782 = vunpack.c.l.b16 %v1594
    %v1783 = vunpack.c.h.b16 %v1594
    %v1784 = vunpack.c.l.b16 %v1595
    %v1785 = vunpack.c.h.b16 %v1595
    %v1786 = vunpack.c.l.b16 %v1596
    %v1787 = vunpack.c.h.b16 %v1596
    %v1788 = vunpack.c.l.b16 %v1597
    %v1789 = vunpack.c.h.b16 %v1597
    %v1790 = vunpack.c.l.b16 %v1598
    %v1791 = vunpack.c.h.b16 %v1598
    %v1792 = vunpack.c.l.b16 %v1599
    %v1793 = vunpack.c.h.b16 %v1599
    %v1794 = vunpack.c.l.b16 %v1600
    %v1795 = vunpack.c.h.b16 %v1600
    %v1796 = vunpack.c.l.b16 %v1601
    %v1797 = vunpack.c.h.b16 %v1601
    %v1798 = vunpack.c.l.b16 %v1602
    %v1799 = vunpack.c.h.b16 %v1602
    %v1800 = vunpack.c.l.b16 %v1603
    %v1801 = vunpack.c.h.b16 %v1603
    %v1802 = vunpack.c.l.b16 %v1604
    %v1803 = vunpack.c.h.b16 %v1604
    %v1804 = vunpack.c.l.b16 %v1605
    %v1805 = vunpack.c.h.b16 %v1605
    %v1806 = vunpack.c.l.b16 %v1606
    %v1807 = vunpack.c.h.b16 %v1606
    %v1808 = vunpack.c.l.b16 %v1607
    %v1809 = vunpack.c.h.b16 %v1607
    %v1810 = vunpack.c.l.b16 %v1608
    %v1811 = vunpack.c.h.b16 %v1608
    %v1812 = vunpack.c.l.b16 %v1609
    %v1813 = vunpack.c.h.b16 %v1609
    %v1814 = vpack.c.b16 %v1688, %v1686
    %v1815 = vpack.c.b16 %v1689, %v1687
    %v1816 = vpack.c.b16 %v1692, %v1690
    %v1817 = vpack.c.b16 %v1693, %v1691
    %v1818 = vpack.c.b16 %v1696, %v1694
    %v1819 = vpack.c.b16 %v1697, %v1695
    %v1820 = vpack.c.b16 %v1700, %v1698
    %v1821 = vpack.c.b16 %v1701, %v1699
    %v1822 = vpack.c.b16 %v1704, %v1702
    %v1823 = vpack.c.b16 %v1705, %v1703
    %v1824 = vpack.c.b16 %v1708, %v1706
    %v1825 = vpack.c.b16 %v1709, %v1707
    %v1826 = vpack.c.b16 %v1712, %v1710
    %v1827 = vpack.c.b16 %v1713, %v1711
    %v1828 = vpack.c.b16 %v1716, %v1714
    %v1829 = vpack.c.b16 %v1717, %v1715
    %v1830 = vpack.c.b16 %v1720, %v1718
    %v1831 = vpack.c.b16 %v1721, %v1719
    %v1832 = vpack.c.b16 %v1724, %v1722
    %v1833 = vpack.c.b16 %v1725, %v1723
    %v1834 = vpack.c.b16 %v1728, %v1726
    %v1835 = vpack.c.b16 %v1729, %v1727
    %v1836 = vpack.c.b16 %v1732, %v1730
    %v1837 = vpack.c.b16 %v1733, %v1731
    %v1838 = vpack.c.b16 %v1736, %v1734
    %v1839 = vpack.c.b16 %v1737, %v1735
    %v1840 = vpack.c.b16 %v1740, %v1738
    %v1841 = vpack.c.b16 %v1741, %v1739
    %v1842 = vpack.c.b16 %v1744, %v1742
    %v1843 = vpack.c.b16 %v1745, %v1743
    %v1844 = vpack.c.b16 %v1748, %v1746
    %v1845 = vpack.c.b16 %v1749, %v1747
    %v1846 = vpack.c.b16 %v1752, %v1750
    %v1847 = vpack.c.b16 %v1753, %v1751
    %v1848 = vpack.c.b16 %v1756, %v1754
    %v1849 = vpack.c.b16 %v1757, %v1755
    %v1850 = vpack.c.b16 %v1760, %v1758
    %v1851 = vpack.c.b16 %v1761, %v1759
    %v1852 = vpack.c.b16 %v1764, %v1762
    %v1853 = vpack.c.b16 %v1765, %v1763
    %v1854 = vpack.c.b16 %v1768, %v1766
    %v1855 = vpack.c.b16 %v1769, %v1767
    %v1856 = vpack.c.b16 %v1772, %v1770
    %v1857 = vpack.c.b16 %v1773, %v1771
    %v1858 = vpack.c.b16 %v1776, %v1774
    %v1859 = vpack.c.b16 %v1777, %v1775
    %v1860 = vpack.c.b16 %v1780, %v1778
    %v1861 = vpack.c.b16 %v1781, %v1779
    %v1862 = vpack.c.b16 %v1784, %v1782
    %v1863 = vpack.c.b16 %v1785, %v1783
    %v1864 = vpack.c.b16 %v1788, %v1786
    %v1865 = vpack.c.b16 %v1789, %v1787
    %v1866 = vpack.c.b16 %v1792, %v1790
    %v1867 = vpack.c.b16 %v1793, %v1791
    %v1868 = vpack.c.b16 %v1796, %v1794
    %v1869 = vpack.c.b16 %v1797, %v1795
    %v1870 = vpack.c.b16 %v1800, %v1798
    %v1871 = vpack.c.b16 %v1801, %v1799
    %v1872 = vpack.c.b16 %v1804, %v1802
    %v1873 = vpack.c.b16 %v1805, %v1803
    %v1874 = vpack.c.b16 %v1808, %v1806
    %v1875 = vpack.c.b16 %v1809, %v1807
    %v1876 = vpack.c.b16 %v1812, %v1810
    %v1877 = vpack.c.b16 %v1813, %v1811
    %1942 = vmatprep.subr.bf16.mxu0 %v1815
    %1943 = vmatpush1.bf16.msra.mxu0 %v1814
    %1944 = vmatprep.subr.bf16.mxu0 %v1817
    %1945 = vmatpush1.bf16.msra.mxu0 %v1816
    %1946 = vmatprep.subr.bf16.mxu0 %v1819
    %1947 = vmatpush1.bf16.msra.mxu0 %v1818
    %1948 = vmatprep.subr.bf16.mxu0 %v1821
    %1949 = vmatpush1.bf16.msra.mxu0 %v1820
    %1950 = vmatprep.subr.bf16.mxu0 %v1823
    %1951 = vmatpush1.bf16.msra.mxu0 %v1822
    %1952 = vmatprep.subr.bf16.mxu0 %v1825
    %1953 = vmatpush1.bf16.msra.mxu0 %v1824
    %1954 = vmatprep.subr.bf16.mxu0 %v1827
    %1955 = vmatpush1.bf16.msra.mxu0 %v1826
    %1956 = vmatprep.subr.bf16.mxu0 %v1829
    %1957 = vmatpush1.bf16.msra.mxu0 %v1828
    %1958 = vmatprep.subr.bf16.mxu0 %v1831
    %1959 = vmatpush1.bf16.msra.mxu0 %v1830
    %1960 = vmatprep.subr.bf16.mxu0 %v1833
    %1961 = vmatpush1.bf16.msra.mxu0 %v1832
    %1962 = vmatprep.subr.bf16.mxu0 %v1835
    %1963 = vmatpush1.bf16.msra.mxu0 %v1834
    %1964 = vmatprep.subr.bf16.mxu0 %v1837
    %1965 = vmatpush1.bf16.msra.mxu0 %v1836
    %1966 = vmatprep.subr.bf16.mxu0 %v1839
    %1967 = vmatpush1.bf16.msra.mxu0 %v1838
    %1968 = vmatprep.subr.bf16.mxu0 %v1841
    %1969 = vmatpush1.bf16.msra.mxu0 %v1840
    %1970 = vmatprep.subr.bf16.mxu0 %v1843
    %1971 = vmatpush1.bf16.msra.mxu0 %v1842
    %1972 = vmatprep.subr.bf16.mxu0 %v1845
    %1973 = vmatpush1.bf16.msra.mxu0 %v1844
    %1974 = vmatprep.mubr.bf16.mxu0 %v1543
    %1975 = vmatmul.mubr.bf16.gmra.mrb[0].mxu0 %v1542
    %v1976 = vpop.f32.mrb[0].mxu0
    %v1977 = vadd.f32 %v1615, %v1976
    %v1978 = vpop.f32.mrb[0].mxu0
    %v1979 = vadd.f32 %v1619, %v1978
    %v1980 = vpop.f32.mrb[0].mxu0
    %v1981 = vpop.f32.mrb[0].mxu0
    %1982 = vdwg.mxu0
    %1983 = vmatprep.subr.bf16.mxu0 %v1847
    %1984 = vmatpush1.bf16.msra.mxu0 %v1846
    %1985 = vmatprep.subr.bf16.mxu0 %v1849
    %1986 = vmatpush1.bf16.msra.mxu0 %v1848
    %1987 = vmatprep.subr.bf16.mxu0 %v1851
    %1988 = vmatpush1.bf16.msra.mxu0 %v1850
    %1989 = vmatprep.subr.bf16.mxu0 %v1853
    %1990 = vmatpush1.bf16.msra.mxu0 %v1852
    %1991 = vmatprep.subr.bf16.mxu0 %v1855
    %1992 = vmatpush1.bf16.msra.mxu0 %v1854
    %1993 = vmatprep.subr.bf16.mxu0 %v1857
    %1994 = vmatpush1.bf16.msra.mxu0 %v1856
    %1995 = vmatprep.subr.bf16.mxu0 %v1859
    %1996 = vmatpush1.bf16.msra.mxu0 %v1858
    %1997 = vmatprep.subr.bf16.mxu0 %v1861
    %1998 = vmatpush1.bf16.msra.mxu0 %v1860
    %1999 = vmatprep.subr.bf16.mxu0 %v1863
    %2000 = vmatpush1.bf16.msra.mxu0 %v1862
    %2001 = vmatprep.subr.bf16.mxu0 %v1865
    %2002 = vmatpush1.bf16.msra.mxu0 %v1864
    %2003 = vmatprep.subr.bf16.mxu0 %v1867
    %2004 = vmatpush1.bf16.msra.mxu0 %v1866
    %2005 = vmatprep.subr.bf16.mxu0 %v1869
    %2006 = vmatpush1.bf16.msra.mxu0 %v1868
    %2007 = vmatprep.subr.bf16.mxu0 %v1871
    %2008 = vmatpush1.bf16.msra.mxu0 %v1870
    %2009 = vmatprep.subr.bf16.mxu0 %v1873
    %2010 = vmatpush1.bf16.msra.mxu0 %v1872
    %2011 = vmatprep.subr.bf16.mxu0 %v1875
    %2012 = vmatpush1.bf16.msra.mxu0 %v1874
    %2013 = vmatprep.subr.bf16.mxu0 %v1877
    %2014 = vmatpush1.bf16.msra.mxu0 %v1876
    %2015 = vmatprep.mubr.bf16.mxu0 %v1545
    %2016 = vmatmul.mubr.bf16.gmra.mrb[0].mxu0 %v1544
    %v2017 = vpop.f32.mrb[0].mxu0
    %v2018 = vadd.f32 %v1977, %v2017
    %v2019 = vpop.f32.mrb[0].mxu0
    %v2020 = vadd.f32 %v1979, %v2019
    %v2021 = vpop.f32.mrb[0].mxu0
    %v2022 = vpop.f32.mrb[0].mxu0
    %2023 = vdwg.mxu0
    %vm2024 = vcmp.ge.f32.partialorder %v2018, 0.0
    %vm2025 = vcmp.ge.f32.partialorder %v2020, 0.0
    %v2026 = vmul.f32 %v2018, 0.3
    %v2027 = vmul.f32 %v2020, 0.3
    %v2028 = vsel %vm2024, %v2018, %v2026
    %v2029 = vsel %vm2025, %v2020, %v2027
    %2030 = vst [vmem:[#allocation10] sm:$0xff] %v2028
    %2031 = vst [vmem:[#allocation10 + $0x8] sm:$0xff] %v2029
    // Predicated region
    $region46: #{tpu_custom_call.1} parent=1 // pred_check
      _
    $region47: #{tpu_custom_call.1} parent=1 // pred_check_branch
      %2033 = sbr.rel (0) target = $region49
    $region48: #{tpu_custom_call.1} parent=1 // pred_region
      %s2035 = ssub.s32 256, 256
      %2036 = vsyncadd [#allocation4], %s2035
      %s2038 = sshll.u32 [#allocation10], 4
      %s2039 = int_to_ptr.vmem [resolvable:$true] %s2038
      %2041 = dma.vmem_to_hbm [thread:$0]  %s2039, 256, %s7, [#allocation4]
    $region49: #{tpu_custom_call.1} parent=1 // pred_fallthru
      _
    // Predicated region
    $region50: #{tpu_custom_call.1} parent=1 // pred_check
      _
    $region51: #{tpu_custom_call.1} parent=1 // pred_check_branch
      %2043 = sbr.rel (0) target = $region53
    $region52: #{tpu_custom_call.1} parent=1 // pred_region
      %2044 = dma.done [#allocation4], 256
    $region53: #{tpu_custom_call.1} parent=1 // pred_fallthru
      _
    %2045 = vsyncpa [#allocation3], 1
    %2046 = vsyncpa [#allocation6], 1
    %2047 = vsyncpa [#allocation9], 1
    %2048 = vsyncpa [#allocation4], 1

</llo_original>
